<compile_context>
chip_gen: v6e
topology: v6e:2x2x1
jax: 0.10.0
libtpu: 0.0.40
codegen_flags: <defaults>
</compile_context>

<pallas_src>
import functools

import jax
import jax.numpy as jnp
from jax.experimental import pallas as pl
from jax.experimental.pallas import tpu as pltpu

BN_EPS = 1e-5


# --------------------------------------------------------------------------
# Fused ResBlock kernel (one batch row per grid step, channels-last layout)
# --------------------------------------------------------------------------
def resblock_kernel(x_ref, s1_ref, b1_ref, w1_ref, b2_ref, w2_ref,
                    o_ref, y1p_ref, z1p_ref, *, K, pad, L1, L2):
    """Fused bn1+relu -> conv1(+bn2 scale) -> +bn2 bias+relu -> conv2 for one batch row.

    x_ref:   (1, L, C_in)        VMEM   input row (f32)
    s1/b1:   (1, C_in)           VMEM   folded BN1 scale / bias (f32)
    w1_ref:  (K, C_in, C_out)    VMEM   conv1 weight with BN2 scale folded in (bf16)
    b2:      (1, C_out)          VMEM   folded BN2 bias (f32)
    w2_ref:  (K, C_out, C_out)   VMEM   conv2 weight (bf16)
    o_ref:   (1, L2, C_out)      VMEM   output row (f32)
    y1p_ref: (L + 2*pad, C_in)   VMEM scratch, zero-padded conv1 input (bf16)
    z1p_ref: (L1 + 2*pad, C_out) VMEM scratch, zero-padded conv2 input (bf16)
    """
    L = x_ref.shape[1]
    c_out = w1_ref.shape[2]

    # Zero the scratch (and thus the halo/pad rows) exactly once; subsequent grid
    # steps only overwrite the interior data rows, so the pads stay zero.
    @pl.when(pl.program_id(0) == 0)
    def _init_pads():
        y1p_ref[...] = jnp.zeros_like(y1p_ref)
        z1p_ref[...] = jnp.zeros_like(z1p_ref)

    # ---- bn1 + relu (VPU, f32 math), cast to bf16 for the MXU ----
    # TODO(synk): Dropout(p=0.1) is identity in eval mode; training-mode masking skipped.
    x = x_ref[0]                                                   # (L, C_in) f32
    y = jnp.maximum(x * s1_ref[...] + b1_ref[...], 0.0).astype(jnp.bfloat16)
    y1p_ref[pad:pad + L, :] = y                                    # interior rows only

    # ---- conv1 (BN2 scale pre-folded into w1): per-tap shifted matmuls, f32 acc ----
    acc1 = jnp.zeros((L1, c_out), jnp.float32)
    for k in range(K):                                             # K static, unrolled
        acc1 = acc1 + jnp.dot(y1p_ref[k:k + L1, :], w1_ref[k],
                              preferred_element_type=jnp.float32)

    # ---- bn2 bias + relu ----
    z = jnp.maximum(acc1 + b2_ref[...], 0.0).astype(jnp.bfloat16)
    z1p_ref[pad:pad + L1, :] = z

    # ---- conv2 ----
    acc2 = jnp.zeros((L2, c_out), jnp.float32)
    for k in range(K):
        acc2 = acc2 + jnp.dot(z1p_ref[k:k + L2, :], w2_ref[k],
                              preferred_element_type=jnp.float32)

    # Single HBM write of this row's output (lane-dense: C_out multiple of 128).
    o_ref[0] = acc2.astype(o_ref.dtype)


# --------------------------------------------------------------------------
# Parameter preparation (fold BN2 scale into conv1 weights; shared w/ reference)
# --------------------------------------------------------------------------
def _prepare(params):
    s1, b1 = params["bn1"]
    s2, b2 = params["bn2"]
    # conv1 is linear, so BN2's per-output-channel scale folds into its weights.
    w1f = (params["w1"].astype(jnp.float32) * s2[0][None, None, :]).astype(jnp.bfloat16)
    w2 = params["w2"]
    return s1, b1, w1f, b2, w2


# --------------------------------------------------------------------------
# Wrapper
# --------------------------------------------------------------------------
def resblock_forward(x_ncw, params, *, kernel_size, padding, stride=1):
    """x_ncw: (B, C_in, L) NCW like PyTorch.  Returns (B, C_out, L2) NCW."""
    # TODO(synk): stride > 1 not implemented (typical ResBlock use is stride=1).
    assert stride == 1, "only stride=1 is implemented"
    # TODO(synk): downsample branch (MaxPool1d(2,2) on out + downsample(x)) not
    #             implemented; the reference forward with downsample=None returns
    #             conv2's output directly and never adds `identity`.

    s1, b1, w1f, b2, w2 = _prepare(params)

    B, C_in, L = x_ncw.shape
    K = kernel_size
    C_out = w1f.shape[2]
    L1 = L + 2 * padding - K + 1
    L2 = L1 + 2 * padding - K + 1

    # channels-last for lane-dense layout inside the kernel
    x = jnp.transpose(x_ncw, (0, 2, 1)).astype(jnp.float32)       # (B, L, C_in)

    kernel = functools.partial(resblock_kernel, K=K, pad=padding, L1=L1, L2=L2)

    flops = 2 * B * K * (L1 * C_in * C_out + L2 * C_out * C_out)
    bytes_accessed = int(x.size * 4 + w1f.size * 2 + w2.size * 2
                         + (s1.size + b1.size + b2.size) * 4
                         + B * L2 * C_out * 4)

    out_blc = pl.pallas_call(
        kernel,
        out_shape=jax.ShapeDtypeStruct((B, L2, C_out), jnp.float32),
        grid_spec=pltpu.PrefetchScalarGridSpec(
            num_scalar_prefetch=0,
            grid=(B,),
            in_specs=[
                pl.BlockSpec((1, L, C_in), lambda b: (b, 0, 0)),       # x
                pl.BlockSpec((1, C_in), lambda b: (0, 0)),             # bn1 scale
                pl.BlockSpec((1, C_in), lambda b: (0, 0)),             # bn1 bias
                pl.BlockSpec((K, C_in, C_out), lambda b: (0, 0, 0)),   # conv1 w (bn2 scale folded)
                pl.BlockSpec((1, C_out), lambda b: (0, 0)),            # bn2 bias
                pl.BlockSpec((K, C_out, C_out), lambda b: (0, 0, 0)),  # conv2 w
            ],
            out_specs=pl.BlockSpec((1, L2, C_out), lambda b: (b, 0, 0)),
            scratch_shapes=[
                pltpu.VMEM((L + 2 * padding, C_in), jnp.bfloat16),
                pltpu.VMEM((L1 + 2 * padding, C_out), jnp.bfloat16),
            ],
        ),
        compiler_params=pltpu.CompilerParams(
            dimension_semantics=("parallel",)),
        cost_estimate=pl.CostEstimate(
            flops=flops, transcendentals=0, bytes_accessed=bytes_accessed),
    )(x, s1, b1, w1f, b2, w2)

    # back to NCW to match the PyTorch module's output layout
    return jnp.transpose(out_blc, (0, 2, 1))


# --------------------------------------------------------------------------
# Pure-JAX reference (mirrors the kernel's math exactly, incl. bf16 casts)
# --------------------------------------------------------------------------
def resblock_reference(x_ncw, params, *, kernel_size, padding):
    s1, b1, w1f, b2, w2 = _prepare(params)
    K = kernel_size
    B, C_in, L = x_ncw.shape
    L1 = L + 2 * padding - K + 1
    L2 = L1 + 2 * padding - K + 1

    x = jnp.transpose(x_ncw, (0, 2, 1)).astype(jnp.float32)           # (B, L, C_in)
    y = jnp.maximum(x * s1 + b1, 0.0).astype(jnp.bfloat16)
    yp = jnp.pad(y, ((0, 0), (padding, padding), (0, 0)))

    acc1 = jnp.zeros((B, L1, w1f.shape[2]), jnp.float32)
    for k in range(K):
        acc1 = acc1 + jnp.einsum("blc,co->blo", yp[:, k:k + L1, :], w1f[k],
                                 preferred_element_type=jnp.float32)

    z = jnp.maximum(acc1 + b2, 0.0).astype(jnp.bfloat16)
    zp = jnp.pad(z, ((0, 0), (padding, padding), (0, 0)))

    acc2 = jnp.zeros((B, L2, w2.shape[2]), jnp.float32)
    for k in range(K):
        acc2 = acc2 + jnp.einsum("blc,co->blo", zp[:, k:k + L2, :], w2[k],
                                 preferred_element_type=jnp.float32)

    return jnp.transpose(acc2, (0, 2, 1))


# --------------------------------------------------------------------------
# Parameter construction (deterministic, synthetic, BN folded for inference)
# --------------------------------------------------------------------------
def _fold_bn(gamma, beta, mean, var):
    scale = gamma / jnp.sqrt(var + BN_EPS)
    bias = beta - mean * scale
    return scale[None, :].astype(jnp.float32), bias[None, :].astype(jnp.float32)


def make_params(key, c_in, c_out, k):
    def nrm(kk, shape, std=0.05):
        return std * jax.random.normal(kk, shape, dtype=jnp.float32)

    keys = jax.random.split(key, 10)
    ki = iter(keys)

    g1 = 1.0 + nrm(next(ki), (c_in,), 0.1)
    be1 = nrm(next(ki), (c_in,), 0.1)
    m1 = nrm(next(ki), (c_in,), 0.1)
    v1 = 1.0 + jnp.abs(nrm(next(ki), (c_in,), 0.1))

    # PyTorch Conv1d weight (C_out, C_in, K) stored transposed as (K, C_in, C_out), bf16.
    w1 = nrm(next(ki), (k, c_in, c_out)).astype(jnp.bfloat16)

    g2 = 1.0 + nrm(next(ki), (c_out,), 0.1)
    be2 = nrm(next(ki), (c_out,), 0.1)
    m2 = nrm(next(ki), (c_out,), 0.1)
    v2 = 1.0 + jnp.abs(nrm(next(ki), (c_out,), 0.1))

    w2 = nrm(next(ki), (k, c_out, c_out)).astype(jnp.bfloat16)

    return {
        "bn1": _fold_bn(g1, be1, m1, v1),
        "w1": w1,
        "bn2": _fold_bn(g2, be2, m2, v2),
        "w2": w2,
    }


if __name__ == "__main__":
    key = jax.random.PRNGKey(0)
    k_param, k_x = jax.random.split(key)

    # Small ResBlock config: in=64, out=128, kernel=5, stride=1, padding=2 ("same")
    B, C_in, C_out, K, PAD, L = 2, 64, 128, 5, 2, 128

    params = make_params(k_param, C_in, C_out, K)
    x = jax.random.normal(k_x, (B, C_in, L), dtype=jnp.float32)   # NCW like PyTorch

    out = resblock_forward(x, params, kernel_size=K, padding=PAD, stride=1)
    out = jax.block_until_ready(out)

    L1 = L + 2 * PAD - K + 1
    L2 = L1 + 2 * PAD - K + 1
    assert out.shape == (B, C_out, L2), out.shape

    ref = jax.block_until_ready(
        resblock_reference(x, params, kernel_size=K, padding=PAD))
    assert jnp.allclose(out, ref, atol=2e-3, rtol=2e-3), \
        float(jnp.max(jnp.abs(out - ref)))

    print("KERNEL_OK")
</pallas_src>

<mosaic_0001>
module attributes {stable_mosaic.version = 11 : i64} {
  func.func @resblock_kernel(%arg0: i32, %arg1: memref<1x128x64xf32, #tpu.memory_space<vmem>>, %arg2: memref<1x64xf32, #tpu.memory_space<vmem>>, %arg3: memref<1x64xf32, #tpu.memory_space<vmem>>, %arg4: memref<5x64x128xbf16, #tpu.memory_space<vmem>>, %arg5: memref<1x128xf32, #tpu.memory_space<vmem>>, %arg6: memref<5x128x128xbf16, #tpu.memory_space<vmem>>, %arg7: memref<1x128x128xf32, #tpu.memory_space<vmem>>, %arg8: memref<132x64xbf16, #tpu.memory_space<vmem>>, %arg9: memref<132x128xbf16, #tpu.memory_space<vmem>>) attributes {dimension_semantics = [#tpu.dimension_semantics<parallel>], iteration_bounds = array<i64: 2>, scalar_prefetch = 0 : i64, scratch_operands = 2 : i64, tpu.core_type = #tpu.core_type<tc>, window_params = [{transform_indices = @transform_0, window_bounds = array<i64: 1, 128, 64>}, {pipeline_mode = #tpu.pipeline_mode<synchronous>, transform_indices = @transform_1, window_bounds = array<i64: 1, 64>}, {pipeline_mode = #tpu.pipeline_mode<synchronous>, transform_indices = @transform_2, window_bounds = array<i64: 1, 64>}, {pipeline_mode = #tpu.pipeline_mode<synchronous>, transform_indices = @transform_3, window_bounds = array<i64: 5, 64, 128>}, {pipeline_mode = #tpu.pipeline_mode<synchronous>, transform_indices = @transform_4, window_bounds = array<i64: 1, 128>}, {pipeline_mode = #tpu.pipeline_mode<synchronous>, transform_indices = @transform_5, window_bounds = array<i64: 5, 128, 128>}, {transform_indices = @transform_6, window_bounds = array<i64: 1, 128, 128>}]} {
    %c0_i32 = arith.constant 0 : i32
    %0 = arith.cmpi eq, %arg0, %c0_i32 : i32
    %1 = arith.extui %0 : i1 to i32
    %c0_i32_0 = arith.constant 0 : i32
    %2 = arith.cmpi ne, %1, %c0_i32_0 : i32
    scf.if %2 {
      %cst_75 = arith.constant 0.000000e+00 : bf16
      %77 = vector.broadcast %cst_75 : bf16 to vector<132x64xbf16>
      %c0_76 = arith.constant 0 : index
      %c0_77 = arith.constant 0 : index
      %78 = vector.load %arg8[%c0_76, %c0_77] : memref<132x64xbf16, #tpu.memory_space<vmem>>, vector<132x64xbf16>
      tpu.vector_store %arg8[%c0_76, %c0_77], %77 {strides = array<i32>} : memref<132x64xbf16, #tpu.memory_space<vmem>>, vector<132x64xbf16>,
      %cst_78 = arith.constant 0.000000e+00 : bf16
      %79 = vector.broadcast %cst_78 : bf16 to vector<132x128xbf16>
      %c0_79 = arith.constant 0 : index
      %c0_80 = arith.constant 0 : index
      %80 = vector.load %arg9[%c0_79, %c0_80] : memref<132x128xbf16, #tpu.memory_space<vmem>>, vector<132x128xbf16>
      tpu.vector_store %arg9[%c0_79, %c0_80], %79 {strides = array<i32>} : memref<132x128xbf16, #tpu.memory_space<vmem>>, vector<132x128xbf16>,
    } else {
    }
    %c0 = arith.constant 0 : index
    %c0_1 = arith.constant 0 : index
    %c0_2 = arith.constant 0 : index
    %3 = vector.load %arg1[%c0, %c0_1, %c0_2] : memref<1x128x64xf32, #tpu.memory_space<vmem>>, vector<1x128x64xf32>
    %4 = vector.shape_cast %3 : vector<1x128x64xf32> to vector<128x64xf32>
    %c0_3 = arith.constant 0 : index
    %c0_4 = arith.constant 0 : index
    %5 = vector.load %arg2[%c0_3, %c0_4] : memref<1x64xf32, #tpu.memory_space<vmem>>, vector<1x64xf32>
    %6 = vector.broadcast %5 : vector<1x64xf32> to vector<128x64xf32>
    %7 = arith.mulf %4, %6 : vector<128x64xf32>
    %c0_5 = arith.constant 0 : index
    %c0_6 = arith.constant 0 : index
    %8 = vector.load %arg3[%c0_5, %c0_6] : memref<1x64xf32, #tpu.memory_space<vmem>>, vector<1x64xf32>
    %9 = vector.broadcast %8 : vector<1x64xf32> to vector<128x64xf32>
    %10 = arith.addf %7, %9 : vector<128x64xf32>
    %cst = arith.constant 0.000000e+00 : f32
    %11 = vector.broadcast %cst : f32 to vector<128x64xf32>
    %12 = arith.maximumf %10, %11 : vector<128x64xf32>
    %13 = arith.truncf %12 : vector<128x64xf32> to vector<128x64xbf16>
    %c2 = arith.constant 2 : index
    %c0_7 = arith.constant 0 : index
    %14 = vector.load %arg8[%c2, %c0_7] : memref<132x64xbf16, #tpu.memory_space<vmem>>, vector<128x64xbf16>
    tpu.vector_store %arg8[%c2, %c0_7], %13 {strides = array<i32>} : memref<132x64xbf16, #tpu.memory_space<vmem>>, vector<128x64xbf16>,
    %cst_8 = arith.constant 0.000000e+00 : f32
    %15 = vector.broadcast %cst_8 : f32 to vector<128x128xf32>
    %c0_9 = arith.constant 0 : index
    %c0_10 = arith.constant 0 : index
    %16 = vector.load %arg8[%c0_9, %c0_10] : memref<132x64xbf16, #tpu.memory_space<vmem>>, vector<128x64xbf16>
    %c0_11 = arith.constant 0 : index
    %c0_12 = arith.constant 0 : index
    %c0_13 = arith.constant 0 : index
    %17 = vector.load %arg4[%c0_11, %c0_12, %c0_13] : memref<5x64x128xbf16, #tpu.memory_space<vmem>>, vector<1x64x128xbf16>
    %18 = vector.shape_cast %17 : vector<1x64x128xbf16> to vector<64x128xbf16>
    %cst_14 = arith.constant dense<0.000000e+00> : vector<128x128xf32>
    %19 = tpu.matmul %16, %18, %cst_14 {dimension_numbers = #tpu.dot_dimension_numbers<[1], [0], [0], [1], [0, 0, 1, 1], [], []>} : vector<128x64xbf16>, vector<64x128xbf16>, vector<128x128xf32> -> vector<128x128xf32>
    %20 = arith.addf %15, %19 : vector<128x128xf32>
    %c1 = arith.constant 1 : index
    %c0_15 = arith.constant 0 : index
    %21 = vector.load %arg8[%c1, %c0_15] : memref<132x64xbf16, #tpu.memory_space<vmem>>, vector<128x64xbf16>
    %c1_16 = arith.constant 1 : index
    %c0_17 = arith.constant 0 : index
    %c0_18 = arith.constant 0 : index
    %22 = vector.load %arg4[%c1_16, %c0_17, %c0_18] : memref<5x64x128xbf16, #tpu.memory_space<vmem>>, vector<1x64x128xbf16>
    %23 = vector.shape_cast %22 : vector<1x64x128xbf16> to vector<64x128xbf16>
    %cst_19 = arith.constant dense<0.000000e+00> : vector<128x128xf32>
    %24 = tpu.matmul %21, %23, %cst_19 {dimension_numbers = #tpu.dot_dimension_numbers<[1], [0], [0], [1], [0, 0, 1, 1], [], []>} : vector<128x64xbf16>, vector<64x128xbf16>, vector<128x128xf32> -> vector<128x128xf32>
    %25 = arith.addf %20, %24 : vector<128x128xf32>
    %c2_20 = arith.constant 2 : index
    %c0_21 = arith.constant 0 : index
    %26 = vector.load %arg8[%c2_20, %c0_21] : memref<132x64xbf16, #tpu.memory_space<vmem>>, vector<128x64xbf16>
    %c2_22 = arith.constant 2 : index
    %c0_23 = arith.constant 0 : index
    %c0_24 = arith.constant 0 : index
    %27 = vector.load %arg4[%c2_22, %c0_23, %c0_24] : memref<5x64x128xbf16, #tpu.memory_space<vmem>>, vector<1x64x128xbf16>
    %28 = vector.shape_cast %27 : vector<1x64x128xbf16> to vector<64x128xbf16>
    %cst_25 = arith.constant dense<0.000000e+00> : vector<128x128xf32>
    %29 = tpu.matmul %26, %28, %cst_25 {dimension_numbers = #tpu.dot_dimension_numbers<[1], [0], [0], [1], [0, 0, 1, 1], [], []>} : vector<128x64xbf16>, vector<64x128xbf16>, vector<128x128xf32> -> vector<128x128xf32>
    %30 = arith.addf %25, %29 : vector<128x128xf32>
    %c3 = arith.constant 3 : index
    %c0_26 = arith.constant 0 : index
    %31 = vector.load %arg8[%c3, %c0_26] : memref<132x64xbf16, #tpu.memory_space<vmem>>, vector<128x64xbf16>
    %c3_27 = arith.constant 3 : index
    %c0_28 = arith.constant 0 : index
    %c0_29 = arith.constant 0 : index
    %32 = vector.load %arg4[%c3_27, %c0_28, %c0_29] : memref<5x64x128xbf16, #tpu.memory_space<vmem>>, vector<1x64x128xbf16>
    %33 = vector.shape_cast %32 : vector<1x64x128xbf16> to vector<64x128xbf16>
    %cst_30 = arith.constant dense<0.000000e+00> : vector<128x128xf32>
    %34 = tpu.matmul %31, %33, %cst_30 {dimension_numbers = #tpu.dot_dimension_numbers<[1], [0], [0], [1], [0, 0, 1, 1], [], []>} : vector<128x64xbf16>, vector<64x128xbf16>, vector<128x128xf32> -> vector<128x128xf32>
    %35 = arith.addf %30, %34 : vector<128x128xf32>
    %c4 = arith.constant 4 : index
    %c0_31 = arith.constant 0 : index
    %36 = vector.load %arg8[%c4, %c0_31] : memref<132x64xbf16, #tpu.memory_space<vmem>>, vector<128x64xbf16>
    %c4_32 = arith.constant 4 : index
    %c0_33 = arith.constant 0 : index
    %c0_34 = arith.constant 0 : index
    %37 = vector.load %arg4[%c4_32, %c0_33, %c0_34] : memref<5x64x128xbf16, #tpu.memory_space<vmem>>, vector<1x64x128xbf16>
    %38 = vector.shape_cast %37 : vector<1x64x128xbf16> to vector<64x128xbf16>
    %cst_35 = arith.constant dense<0.000000e+00> : vector<128x128xf32>
    %39 = tpu.matmul %36, %38, %cst_35 {dimension_numbers = #tpu.dot_dimension_numbers<[1], [0], [0], [1], [0, 0, 1, 1], [], []>} : vector<128x64xbf16>, vector<64x128xbf16>, vector<128x128xf32> -> vector<128x128xf32>
    %40 = arith.addf %35, %39 : vector<128x128xf32>
    %c0_36 = arith.constant 0 : index
    %c0_37 = arith.constant 0 : index
    %41 = vector.load %arg5[%c0_36, %c0_37] : memref<1x128xf32, #tpu.memory_space<vmem>>, vector<1x128xf32>
    %42 = vector.broadcast %41 : vector<1x128xf32> to vector<128x128xf32>
    %43 = arith.addf %40, %42 : vector<128x128xf32>
    %cst_38 = arith.constant 0.000000e+00 : f32
    %44 = vector.broadcast %cst_38 : f32 to vector<128x128xf32>
    %45 = arith.maximumf %43, %44 : vector<128x128xf32>
    %46 = arith.truncf %45 : vector<128x128xf32> to vector<128x128xbf16>
    %c2_39 = arith.constant 2 : index
    %c0_40 = arith.constant 0 : index
    %47 = vector.load %arg9[%c2_39, %c0_40] : memref<132x128xbf16, #tpu.memory_space<vmem>>, vector<128x128xbf16>
    tpu.vector_store %arg9[%c2_39, %c0_40], %46 {strides = array<i32>} : memref<132x128xbf16, #tpu.memory_space<vmem>>, vector<128x128xbf16>,
    %cst_41 = arith.constant 0.000000e+00 : f32
    %48 = vector.broadcast %cst_41 : f32 to vector<128x128xf32>
    %c0_42 = arith.constant 0 : index
    %c0_43 = arith.constant 0 : index
    %49 = vector.load %arg9[%c0_42, %c0_43] : memref<132x128xbf16, #tpu.memory_space<vmem>>, vector<128x128xbf16>
    %c0_44 = arith.constant 0 : index
    %c0_45 = arith.constant 0 : index
    %c0_46 = arith.constant 0 : index
    %50 = vector.load %arg6[%c0_44, %c0_45, %c0_46] : memref<5x128x128xbf16, #tpu.memory_space<vmem>>, vector<1x128x128xbf16>
    %51 = vector.shape_cast %50 : vector<1x128x128xbf16> to vector<128x128xbf16>
    %cst_47 = arith.constant dense<0.000000e+00> : vector<128x128xf32>
    %52 = tpu.matmul %49, %51, %cst_47 {dimension_numbers = #tpu.dot_dimension_numbers<[1], [0], [0], [1], [0, 0, 1, 1], [], []>} : vector<128x128xbf16>, vector<128x128xbf16>, vector<128x128xf32> -> vector<128x128xf32>
    %53 = arith.addf %48, %52 : vector<128x128xf32>
    %c1_48 = arith.constant 1 : index
    %c0_49 = arith.constant 0 : index
    %54 = vector.load %arg9[%c1_48, %c0_49] : memref<132x128xbf16, #tpu.memory_space<vmem>>, vector<128x128xbf16>
    %c1_50 = arith.constant 1 : index
    %c0_51 = arith.constant 0 : index
    %c0_52 = arith.constant 0 : index
    %55 = vector.load %arg6[%c1_50, %c0_51, %c0_52] : memref<5x128x128xbf16, #tpu.memory_space<vmem>>, vector<1x128x128xbf16>
    %56 = vector.shape_cast %55 : vector<1x128x128xbf16> to vector<128x128xbf16>
    %cst_53 = arith.constant dense<0.000000e+00> : vector<128x128xf32>
    %57 = tpu.matmul %54, %56, %cst_53 {dimension_numbers = #tpu.dot_dimension_numbers<[1], [0], [0], [1], [0, 0, 1, 1], [], []>} : vector<128x128xbf16>, vector<128x128xbf16>, vector<128x128xf32> -> vector<128x128xf32>
    %58 = arith.addf %53, %57 : vector<128x128xf32>
    %c2_54 = arith.constant 2 : index
    %c0_55 = arith.constant 0 : index
    %59 = vector.load %arg9[%c2_54, %c0_55] : memref<132x128xbf16, #tpu.memory_space<vmem>>, vector<128x128xbf16>
    %c2_56 = arith.constant 2 : index
    %c0_57 = arith.constant 0 : index
    %c0_58 = arith.constant 0 : index
    %60 = vector.load %arg6[%c2_56, %c0_57, %c0_58] : memref<5x128x128xbf16, #tpu.memory_space<vmem>>, vector<1x128x128xbf16>
    %61 = vector.shape_cast %60 : vector<1x128x128xbf16> to vector<128x128xbf16>
    %cst_59 = arith.constant dense<0.000000e+00> : vector<128x128xf32>
    %62 = tpu.matmul %59, %61, %cst_59 {dimension_numbers = #tpu.dot_dimension_numbers<[1], [0], [0], [1], [0, 0, 1, 1], [], []>} : vector<128x128xbf16>, vector<128x128xbf16>, vector<128x128xf32> -> vector<128x128xf32>
    %63 = arith.addf %58, %62 : vector<128x128xf32>
    %c3_60 = arith.constant 3 : index
    %c0_61 = arith.constant 0 : index
    %64 = vector.load %arg9[%c3_60, %c0_61] : memref<132x128xbf16, #tpu.memory_space<vmem>>, vector<128x128xbf16>
    %c3_62 = arith.constant 3 : index
    %c0_63 = arith.constant 0 : index
    %c0_64 = arith.constant 0 : index
    %65 = vector.load %arg6[%c3_62, %c0_63, %c0_64] : memref<5x128x128xbf16, #tpu.memory_space<vmem>>, vector<1x128x128xbf16>
    %66 = vector.shape_cast %65 : vector<1x128x128xbf16> to vector<128x128xbf16>
    %cst_65 = arith.constant dense<0.000000e+00> : vector<128x128xf32>
    %67 = tpu.matmul %64, %66, %cst_65 {dimension_numbers = #tpu.dot_dimension_numbers<[1], [0], [0], [1], [0, 0, 1, 1], [], []>} : vector<128x128xbf16>, vector<128x128xbf16>, vector<128x128xf32> -> vector<128x128xf32>
    %68 = arith.addf %63, %67 : vector<128x128xf32>
    %c4_66 = arith.constant 4 : index
    %c0_67 = arith.constant 0 : index
    %69 = vector.load %arg9[%c4_66, %c0_67] : memref<132x128xbf16, #tpu.memory_space<vmem>>, vector<128x128xbf16>
    %c4_68 = arith.constant 4 : index
    %c0_69 = arith.constant 0 : index
    %c0_70 = arith.constant 0 : index
    %70 = vector.load %arg6[%c4_68, %c0_69, %c0_70] : memref<5x128x128xbf16, #tpu.memory_space<vmem>>, vector<1x128x128xbf16>
    %71 = vector.shape_cast %70 : vector<1x128x128xbf16> to vector<128x128xbf16>
    %cst_71 = arith.constant dense<0.000000e+00> : vector<128x128xf32>
    %72 = tpu.matmul %69, %71, %cst_71 {dimension_numbers = #tpu.dot_dimension_numbers<[1], [0], [0], [1], [0, 0, 1, 1], [], []>} : vector<128x128xbf16>, vector<128x128xbf16>, vector<128x128xf32> -> vector<128x128xf32>
    %73 = arith.addf %68, %72 : vector<128x128xf32>
    %c0_72 = arith.constant 0 : index
    %c0_73 = arith.constant 0 : index
    %c0_74 = arith.constant 0 : index
    %74 = vector.load %arg7[%c0_72, %c0_73, %c0_74] : memref<1x128x128xf32, #tpu.memory_space<vmem>>, vector<1x128x128xf32>
    %75 = vector.shape_cast %74 : vector<1x128x128xf32> to vector<128x128xf32>
    %76 = vector.shape_cast %73 : vector<128x128xf32> to vector<1x128x128xf32>
    tpu.vector_store %arg7[%c0_72, %c0_73, %c0_74], %76 {strides = array<i32>} : memref<1x128x128xf32, #tpu.memory_space<vmem>>, vector<1x128x128xf32>,
    return
  }
  func.func @transform_0(%arg0: i32) -> (i32, i32, i32) {
    %c0_i32 = arith.constant 0 : i32
    %c0_i32_0 = arith.constant 0 : i32
    %c0_i32_1 = arith.constant 0 : i32
    return %arg0, %c0_i32, %c0_i32_0 : i32, i32, i32
  }
  func.func @transform_1(%arg0: i32) -> (i32, i32) {
    %c0_i32 = arith.constant 0 : i32
    %c0_i32_0 = arith.constant 0 : i32
    %c0_i32_1 = arith.constant 0 : i32
    return %c0_i32, %c0_i32_0 : i32, i32
  }
  func.func @transform_2(%arg0: i32) -> (i32, i32) {
    %c0_i32 = arith.constant 0 : i32
    %c0_i32_0 = arith.constant 0 : i32
    %c0_i32_1 = arith.constant 0 : i32
    return %c0_i32, %c0_i32_0 : i32, i32
  }
  func.func @transform_3(%arg0: i32) -> (i32, i32, i32) {
    %c0_i32 = arith.constant 0 : i32
    %c0_i32_0 = arith.constant 0 : i32
    %c0_i32_1 = arith.constant 0 : i32
    %c0_i32_2 = arith.constant 0 : i32
    return %c0_i32, %c0_i32_0, %c0_i32_1 : i32, i32, i32
  }
  func.func @transform_4(%arg0: i32) -> (i32, i32) {
    %c0_i32 = arith.constant 0 : i32
    %c0_i32_0 = arith.constant 0 : i32
    %c0_i32_1 = arith.constant 0 : i32
    return %c0_i32, %c0_i32_0 : i32, i32
  }
  func.func @transform_5(%arg0: i32) -> (i32, i32, i32) {
    %c0_i32 = arith.constant 0 : i32
    %c0_i32_0 = arith.constant 0 : i32
    %c0_i32_1 = arith.constant 0 : i32
    %c0_i32_2 = arith.constant 0 : i32
    return %c0_i32, %c0_i32_0, %c0_i32_1 : i32, i32, i32
  }
  func.func @transform_6(%arg0: i32) -> (i32, i32, i32) {
    %c0_i32 = arith.constant 0 : i32
    %c0_i32_0 = arith.constant 0 : i32
    %c0_i32_1 = arith.constant 0 : i32
    return %arg0, %c0_i32, %c0_i32_0 : i32, i32, i32
  }
}

</mosaic_0001>

<llo_original>
// kernel: tpu_custom_call.1
$region0: #{tpu_custom_call.1}
  #allocation0 [shape = 'u32[]', space=smem, size = 0x4, offset = 0x4, fixed_abs, tag = 'smem constant byte address 0x4 - core index']
  #allocation1 [shape = 'u32[144,128]{1,0:T(1,128)}', space=vmem, size = 0x12000, scoped, tag = 'internal scratch']
  #allocation2 [shape = 'bf16[132,64]{1,0:T(8,128)(2,1)}', space=vmem, size = 0x8800, scoped, tag = 'scratch operand']
  #allocation3 [shape = 'bf16[132,128]{1,0:T(8,128)(2,1)}', space=vmem, size = 0x8800, scoped, tag = 'scratch operand']
  %s0 = inlined_call_operand.vmem [shape: f32[2,128,64], index: 0, kind: input, shape index: {}]
  %s1 = inlined_call_operand.vmem [shape: f32[1,64], index: 1, kind: input, shape index: {}]
  %s2 = inlined_call_operand.vmem [shape: f32[1,64], index: 2, kind: input, shape index: {}]
  %s3 = inlined_call_operand.hbm [shape: bf16[5,64,128], index: 3, kind: input, shape index: {}]
  %s4 = inlined_call_operand.vmem [shape: f32[1,128], index: 4, kind: input, shape index: {}]
  %s5 = inlined_call_operand.vmem [shape: bf16[5,128,128], index: 5, kind: input, shape index: {}]
  %s6 = inlined_call_operand.hbm [shape: f32[2,128,128], index: 6, kind: output, shape index: {}]
  %s7 = sld [smem:[#allocation0]]
  $region65: #{tpu_custom_call.1} parent=0
    _
  %s9 = ssub.s32 1, %s7
  %s10 = scalar_select 0, %s9, %s7
  $region1: #{tpu_custom_call.1} parent=0
    #allocation4 [shape = 'u8[81920]{0}', space=vmem, size = 0x14000, scoped, tag = 'input window, operand 3, single buffered']
    #allocation5 [shape = 's32[2]{0}', space=sflag, size = 0x8, scoped, tag = 'scoped memory for tpu_custom_call.1']
    #allocation6 [shape = 's32[2]{0}', space=sflag, size = 0x8, scoped, tag = 'scoped memory for tpu_custom_call.1']
    #allocation7 [shape = 'u8[131072]{0}', space=vmem, size = 0x20000, scoped, tag = 'output window, operand 0']
    %11 = vsyncpa [#allocation5], 0
    %12 = vsyncpa [#allocation6], 0
    %s13 = scalar_lea.sflag [#allocation6], 1
    %14 = vsyncpa %s13, 0
    loop: start=0, step=1, limit=4
    $region2: #{tpu_custom_call.1} parent=1 // loop_pre_header
      _
    $region3: #{tpu_custom_call.1} parent=1 // loop_header
      %s16 = sphi 0, %s20
      %p17 = scmp.ge.s32.totalorder %s16, 4
      %s26 = sphi 0, %s28
      %s29 = sphi 0, %s26
      %s30 = sphi 0, %s29
      %s46 = sphi 0, %s30
      %s50 = sphi 0, %s50
      %s52 = sphi 0, %s50
      %s53 = sphi 0, %s52
      %s67 = sphi 0, %s53
      %s71 = sphi 0, %s71
      %s73 = sphi 0, %s71
      %s74 = sphi 0, %s73
      %s88 = sphi 0, %s74
      %s92 = sphi 0, %s92
      %s94 = sphi 0, %s92
      %s95 = sphi 0, %s94
      %s109 = sphi 0, %s95
      %s113 = sphi 0, %s113
      %s115 = sphi 0, %s113
      %s116 = sphi 0, %s115
      %s130 = sphi 0, %s116
      %s134 = sphi 0, %s134
      %s136 = sphi 0, %s134
      %s137 = sphi 0, %s136
      %s151 = sphi 0, %s137
      %s157 = sphi 0, %s159
      %s160 = sphi 0, %s157
      %s161 = sphi 0, %s160
      %s177 = sphi 0, %s161
    $region4: #{tpu_custom_call.1} parent=1 // loop_header_branch
      %19 = sbr.rel (%p17) target = $region8
    $region5: #{tpu_custom_call.1} parent=1 // loop_body
      %s21 = ssub.s32 %s16, 1
      %s22 = ssub.s32 %s16, 2
      %s23 = sadd.s32 %s16, 1
      %s24 = ssub.s32 %s16, %s23
      %p25 = scmp.eq.s32.totalorder %s24, 0
      %s27 = sadd.s32 %s26, 1
      %s28 = scalar_select %p25, %s26, %s27
      %p31 = pneg %p25
      %p32 = scmp.eq.s32.totalorder %s16, 1
      %p33 = por %p31, %p32
      %p34 = scmp.ne.s32.totalorder %s26, %s29
      %p35 = scmp.eq.s32.totalorder %s16, 0
      %p36 = por %p34, %p35
      %p37 = scmp.ne.s32.totalorder %s26, %s29
      %p38 = scmp.eq.s32.totalorder %s21, 1
      %p39 = por %p37, %p38
      %p40 = scmp.ne.s32.totalorder %s29, %s30
      %p41 = scmp.eq.s32.totalorder %s21, 0
      %p42 = por %p40, %p41
      %p43 = scmp.ne.s32.totalorder %s29, %s30
      %p44 = scmp.eq.s32.totalorder %s22, 1
      %p45 = por %p43, %p44
      %p47 = scmp.ne.s32.totalorder %s30, %s46
      %p48 = scmp.eq.s32.totalorder %s22, 0
      %p49 = por %p47, %p48
      %s51 = sadd.s32 %s50, 1
      %p54 = scmp.eq.s32.totalorder %s16, 1
      %p55 = scmp.ne.s32.totalorder %s50, %s52
      %p56 = scmp.eq.s32.totalorder %s16, 0
      %p57 = por %p55, %p56
      %p58 = scmp.ne.s32.totalorder %s50, %s52
      %p59 = scmp.eq.s32.totalorder %s21, 1
      %p60 = por %p58, %p59
      %p61 = scmp.ne.s32.totalorder %s52, %s53
      %p62 = scmp.eq.s32.totalorder %s21, 0
      %p63 = por %p61, %p62
      %p64 = scmp.ne.s32.totalorder %s52, %s53
      %p65 = scmp.eq.s32.totalorder %s22, 1
      %p66 = por %p64, %p65
      %p68 = scmp.ne.s32.totalorder %s53, %s67
      %p69 = scmp.eq.s32.totalorder %s22, 0
      %p70 = por %p68, %p69
      %s72 = sadd.s32 %s71, 1
      %p75 = scmp.eq.s32.totalorder %s16, 1
      %p76 = scmp.ne.s32.totalorder %s71, %s73
      %p77 = scmp.eq.s32.totalorder %s16, 0
      %p78 = por %p76, %p77
      %p79 = scmp.ne.s32.totalorder %s71, %s73
      %p80 = scmp.eq.s32.totalorder %s21, 1
      %p81 = por %p79, %p80
      %p82 = scmp.ne.s32.totalorder %s73, %s74
      %p83 = scmp.eq.s32.totalorder %s21, 0
      %p84 = por %p82, %p83
      %p85 = scmp.ne.s32.totalorder %s73, %s74
      %p86 = scmp.eq.s32.totalorder %s22, 1
      %p87 = por %p85, %p86
      %p89 = scmp.ne.s32.totalorder %s74, %s88
      %p90 = scmp.eq.s32.totalorder %s22, 0
      %p91 = por %p89, %p90
      %s93 = sadd.s32 %s92, 1
      %p96 = scmp.eq.s32.totalorder %s16, 1
      %p97 = scmp.ne.s32.totalorder %s92, %s94
      %p98 = scmp.eq.s32.totalorder %s16, 0
      %p99 = por %p97, %p98
      %p100 = scmp.ne.s32.totalorder %s92, %s94
      %p101 = scmp.eq.s32.totalorder %s21, 1
      %p102 = por %p100, %p101
      %p103 = scmp.ne.s32.totalorder %s94, %s95
      %p104 = scmp.eq.s32.totalorder %s21, 0
      %p105 = por %p103, %p104
      %p106 = scmp.ne.s32.totalorder %s94, %s95
      %p107 = scmp.eq.s32.totalorder %s22, 1
      %p108 = por %p106, %p107
      %p110 = scmp.ne.s32.totalorder %s95, %s109
      %p111 = scmp.eq.s32.totalorder %s22, 0
      %p112 = por %p110, %p111
      %s114 = sadd.s32 %s113, 1
      %p117 = scmp.eq.s32.totalorder %s16, 1
      %p118 = scmp.ne.s32.totalorder %s113, %s115
      %p119 = scmp.eq.s32.totalorder %s16, 0
      %p120 = por %p118, %p119
      %p121 = scmp.ne.s32.totalorder %s113, %s115
      %p122 = scmp.eq.s32.totalorder %s21, 1
      %p123 = por %p121, %p122
      %p124 = scmp.ne.s32.totalorder %s115, %s116
      %p125 = scmp.eq.s32.totalorder %s21, 0
      %p126 = por %p124, %p125
      %p127 = scmp.ne.s32.totalorder %s115, %s116
      %p128 = scmp.eq.s32.totalorder %s22, 1
      %p129 = por %p127, %p128
      %p131 = scmp.ne.s32.totalorder %s116, %s130
      %p132 = scmp.eq.s32.totalorder %s22, 0
      %p133 = por %p131, %p132
      %s135 = sadd.s32 %s134, 1
      %p138 = scmp.eq.s32.totalorder %s16, 1
      %p139 = scmp.ne.s32.totalorder %s134, %s136
      %p140 = scmp.eq.s32.totalorder %s16, 0
      %p141 = por %p139, %p140
      %p142 = scmp.ne.s32.totalorder %s134, %s136
      %p143 = scmp.eq.s32.totalorder %s21, 1
      %p144 = por %p142, %p143
      %p145 = scmp.ne.s32.totalorder %s136, %s137
      %p146 = scmp.eq.s32.totalorder %s21, 0
      %p147 = por %p145, %p146
      %p148 = scmp.ne.s32.totalorder %s136, %s137
      %p149 = scmp.eq.s32.totalorder %s22, 1
      %p150 = por %p148, %p149
      %p152 = scmp.ne.s32.totalorder %s137, %s151
      %p153 = scmp.eq.s32.totalorder %s22, 0
      %p154 = por %p152, %p153
      %s155 = ssub.s32 %s16, %s23
      %p156 = scmp.eq.s32.totalorder %s155, 0
      %s158 = sadd.s32 %s157, 1
      %s159 = scalar_select %p156, %s157, %s158
      %p162 = pneg %p156
      %p163 = scmp.eq.s32.totalorder %s16, 1
      %p164 = por %p162, %p163
      %p165 = scmp.ne.s32.totalorder %s157, %s160
      %p166 = scmp.eq.s32.totalorder %s16, 0
      %p167 = por %p165, %p166
      %p168 = scmp.ne.s32.totalorder %s157, %s160
      %p169 = scmp.eq.s32.totalorder %s21, 1
      %p170 = por %p168, %p169
      %p171 = scmp.ne.s32.totalorder %s160, %s161
      %p172 = scmp.eq.s32.totalorder %s21, 0
      %p173 = por %p171, %p172
      %p174 = scmp.ne.s32.totalorder %s160, %s161
      %p175 = scmp.eq.s32.totalorder %s22, 1
      %p176 = por %p174, %p175
      %p178 = scmp.ne.s32.totalorder %s161, %s177
      %p179 = scmp.eq.s32.totalorder %s22, 0
      %p180 = por %p178, %p179
      %p181 = scmp.le.s32.totalorder 1, %s16
      %p182 = scmp.lt.s32.totalorder %s16, 3
      %p183 = pnand %p181, %p182
      %p184 = pneg %p183
      // Predicated region
      $region9: #{tpu_custom_call.1} parent=5 // pred_check
        _
      $region10: #{tpu_custom_call.1} parent=5 // pred_check_branch
        %186 = sbr.rel (%p183) target = $region12
      $region11: #{tpu_custom_call.1} parent=5 // pred_region
        %s187 = ssub.s32 %s16, 1
        // Predicated region
        $region13: #{tpu_custom_call.1} parent=11 // pred_check
          %p188 = pneg %p63
        $region14: #{tpu_custom_call.1} parent=11 // pred_check_branch
          %190 = sbr.rel (%p188) target = $region16
        $region15: #{tpu_custom_call.1} parent=11 // pred_region
          _
        $region16: #{tpu_custom_call.1} parent=11 // pred_fallthru
          _
        // Predicated region
        $region17: #{tpu_custom_call.1} parent=11 // pred_check
          %p191 = pneg %p84
        $region18: #{tpu_custom_call.1} parent=11 // pred_check_branch
          %193 = sbr.rel (%p191) target = $region20
        $region19: #{tpu_custom_call.1} parent=11 // pred_region
          _
        $region20: #{tpu_custom_call.1} parent=11 // pred_fallthru
          _
        // Predicated region
        $region21: #{tpu_custom_call.1} parent=11 // pred_check
          %p194 = pneg %p105
        $region22: #{tpu_custom_call.1} parent=11 // pred_check_branch
          %196 = sbr.rel (%p194) target = $region24
        $region23: #{tpu_custom_call.1} parent=11 // pred_region
          %s198 = ssub.s32 2560, 2560
          %199 = vsyncadd [#allocation5], %s198
          %s200 = sshll.u32 [#allocation4], 4
          %s201 = int_to_ptr.vmem [resolvable:$true] %s200
          %206 = dma.hbm_to_vmem [thread:$0]  %s3, 2560, %s201, [#allocation5], 64, 64, 4
        $region24: #{tpu_custom_call.1} parent=11 // pred_fallthru
          _
        // Predicated region
        $region25: #{tpu_custom_call.1} parent=11 // pred_check
          %p207 = pneg %p126
        $region26: #{tpu_custom_call.1} parent=11 // pred_check_branch
          %209 = sbr.rel (%p207) target = $region28
        $region27: #{tpu_custom_call.1} parent=11 // pred_region
          _
        $region28: #{tpu_custom_call.1} parent=11 // pred_fallthru
          _
        // Predicated region
        $region29: #{tpu_custom_call.1} parent=11 // pred_check
          %p210 = pneg %p147
        $region30: #{tpu_custom_call.1} parent=11 // pred_check_branch
          %212 = sbr.rel (%p210) target = $region32
        $region31: #{tpu_custom_call.1} parent=11 // pred_region
          _
        $region32: #{tpu_custom_call.1} parent=11 // pred_fallthru
          _
      $region12: #{tpu_custom_call.1} parent=5 // pred_fallthru
        _
      %p213 = scmp.lt.s32.totalorder %s16, 2
      // Predicated region
      $region33: #{tpu_custom_call.1} parent=5 // pred_check
        %p214 = pneg %p213
      $region34: #{tpu_custom_call.1} parent=5 // pred_check_branch
        %216 = sbr.rel (%p214) target = $region36
      $region35: #{tpu_custom_call.1} parent=5 // pred_region
        // Predicated region
        $region37: #{tpu_custom_call.1} parent=35 // pred_check
          %p217 = pneg %p36
        $region38: #{tpu_custom_call.1} parent=35 // pred_check_branch
          %219 = sbr.rel (%p217) target = $region40
        $region39: #{tpu_custom_call.1} parent=35 // pred_region
          %p220 = scmp.lt.s32.totalorder %s16, 1
          %s221 = scalar_select %p220, %s16, 1
          %s222 = smul.addr %s221, 16
          %s223 = smul.addr %s222, 8
          %s224 = scalar_lea.vmem %s0, %s223
        $region40: #{tpu_custom_call.1} parent=35 // pred_fallthru
          _
      $region36: #{tpu_custom_call.1} parent=5 // pred_fallthru
        _
      %p225 = scmp.le.s32.totalorder 1, %s16
      %p226 = scmp.lt.s32.totalorder %s16, 3
      %p227 = pnand %p225, %p226
      %p228 = pneg %p227
      // Predicated region
      $region41: #{tpu_custom_call.1} parent=5 // pred_check
        _
      $region42: #{tpu_custom_call.1} parent=5 // pred_check_branch
        %230 = sbr.rel (%p227) target = $region44
      $region43: #{tpu_custom_call.1} parent=5 // pred_region
        %s231 = ssub.s32 %s16, 1
        // Predicated region
        $region45: #{tpu_custom_call.1} parent=43 // pred_check
          %p232 = pneg %p105
        $region46: #{tpu_custom_call.1} parent=43 // pred_check_branch
          %234 = sbr.rel (%p232) target = $region48
        $region47: #{tpu_custom_call.1} parent=43 // pred_region
          %235 = dma.done [#allocation5], 2560
        $region48: #{tpu_custom_call.1} parent=43 // pred_fallthru
          _
        %p236 = scmp.lt.s32.totalorder %s21, 1
        %s237 = scalar_select %p236, %s21, 1
        %s238 = smul.addr %s237, 16
        %s239 = smul.addr %s238, 8
        %s240 = scalar_lea.vmem %s0, %s239
        %p241 = pneg %p42
        %p242 = pneg %p39
        %p243 = pneg %p63
        %p244 = pneg %p60
        %p245 = pneg %p84
        %p246 = pneg %p81
        %p247 = pneg %p105
        %p248 = pneg %p102
        %p249 = pneg %p126
        %p250 = pneg %p123
        %p251 = pneg %p147
        %p252 = pneg %p144
        %p253 = pneg %p173
        %p254 = pneg %p170
        %s255 = sand.u32 %s160, 1
        %s256 = scalar_lea.sflag [#allocation6], %s255
        %s257 = sand.u32 %s160, 1
        %s258 = smul.addr %s257, 128
        %s259 = scalar_lea.vmem [#allocation7], %s258
        %p260 = scmp.lt.s32.totalorder %s21, 1
        %s261 = scalar_select %p260, %s21, 1
        %s262 = smul.addr %s261, 16
        %s263 = smul.addr %s262, 8
        %s264 = scalar_lea.vmem %s0, %s263
        %p266 = scmp.eq.s32.totalorder %s21, 0
        // Predicated region
        $region49: #{tpu_custom_call.1} parent=43 // pred_check
          %p267 = pneg %p266
        $region50: #{tpu_custom_call.1} parent=43 // pred_check_branch
          %269 = sbr.rel (%p267) target = $region52
        $region51: #{tpu_custom_call.1} parent=43 // pred_region
          %vm270 = vcmask 519168
          %271 = vst.msk [vmem:[#allocation2] sm:$0xf] %vm270, 0
          %272 = vst.msk [vmem:[#allocation2 + $0x4] sm:$0xf] %vm270, 0
          %273 = vst.msk [vmem:[#allocation2 + $0x8] sm:$0xf] %vm270, 0
          %274 = vst.msk [vmem:[#allocation2 + $0xc] sm:$0xf] %vm270, 0
          %275 = vst.msk [vmem:[#allocation2 + $0x10] sm:$0xf] %vm270, 0
          %276 = vst.msk [vmem:[#allocation2 + $0x14] sm:$0xf] %vm270, 0
          %277 = vst.msk [vmem:[#allocation2 + $0x18] sm:$0xf] %vm270, 0
          %278 = vst.msk [vmem:[#allocation2 + $0x1c] sm:$0xf] %vm270, 0
          %279 = vst.msk [vmem:[#allocation2 + $0x20] sm:$0xf] %vm270, 0
          %280 = vst.msk [vmem:[#allocation2 + $0x24] sm:$0xf] %vm270, 0
          %281 = vst.msk [vmem:[#allocation2 + $0x28] sm:$0xf] %vm270, 0
          %282 = vst.msk [vmem:[#allocation2 + $0x2c] sm:$0xf] %vm270, 0
          %283 = vst.msk [vmem:[#allocation2 + $0x30] sm:$0xf] %vm270, 0
          %284 = vst.msk [vmem:[#allocation2 + $0x34] sm:$0xf] %vm270, 0
          %285 = vst.msk [vmem:[#allocation2 + $0x38] sm:$0xf] %vm270, 0
          %286 = vst.msk [vmem:[#allocation2 + $0x3c] sm:$0xf] %vm270, 0
          %vm287 = vcmask 517120
          %288 = vst.msk [vmem:[#allocation2 + $0x40] sm:$0x3] %vm287, 0
          %289 = vst [vmem:[#allocation3] sm:$0xf] 0
          %290 = vst [vmem:[#allocation3 + $0x4] sm:$0xf] 0
          %291 = vst [vmem:[#allocation3 + $0x8] sm:$0xf] 0
          %292 = vst [vmem:[#allocation3 + $0xc] sm:$0xf] 0
          %293 = vst [vmem:[#allocation3 + $0x10] sm:$0xf] 0
          %294 = vst [vmem:[#allocation3 + $0x14] sm:$0xf] 0
          %295 = vst [vmem:[#allocation3 + $0x18] sm:$0xf] 0
          %296 = vst [vmem:[#allocation3 + $0x1c] sm:$0xf] 0
          %297 = vst [vmem:[#allocation3 + $0x20] sm:$0xf] 0
          %298 = vst [vmem:[#allocation3 + $0x24] sm:$0xf] 0
          %299 = vst [vmem:[#allocation3 + $0x28] sm:$0xf] 0
          %300 = vst [vmem:[#allocation3 + $0x2c] sm:$0xf] 0
          %301 = vst [vmem:[#allocation3 + $0x30] sm:$0xf] 0
          %302 = vst [vmem:[#allocation3 + $0x34] sm:$0xf] 0
          %303 = vst [vmem:[#allocation3 + $0x38] sm:$0xf] 0
          %304 = vst [vmem:[#allocation3 + $0x3c] sm:$0xf] 0
          %305 = vst [vmem:[#allocation3 + $0x40] sm:$0x3] 0
        $region52: #{tpu_custom_call.1} parent=43 // pred_fallthru
          _
        %v306 = vld [vmem:[%s264] sm:$0xff]
        %v307 = vld [vmem:[%s264 + $0x8] sm:$0xff]
        %v308 = vld [vmem:[%s264 + $0x10] sm:$0xff]
        %v309 = vld [vmem:[%s264 + $0x18] sm:$0xff]
        %v310 = vld [vmem:[%s264 + $0x20] sm:$0xff]
        %v311 = vld [vmem:[%s264 + $0x28] sm:$0xff]
        %v312 = vld [vmem:[%s264 + $0x30] sm:$0xff]
        %v313 = vld [vmem:[%s264 + $0x38] sm:$0xff]
        %v314 = vld [vmem:[%s264 + $0x40] sm:$0xff]
        %v315 = vld [vmem:[%s264 + $0x48] sm:$0xff]
        %v316 = vld [vmem:[%s264 + $0x50] sm:$0xff]
        %v317 = vld [vmem:[%s264 + $0x58] sm:$0xff]
        %v318 = vld [vmem:[%s264 + $0x60] sm:$0xff]
        %v319 = vld [vmem:[%s264 + $0x68] sm:$0xff]
        %v320 = vld [vmem:[%s264 + $0x70] sm:$0xff]
        %v321 = vld [vmem:[%s264 + $0x78] sm:$0xff]
        %v322 = vld [vmem:[%s1] sm:$0x1]
        %v324 = vlaneseq
        %v325 = vshrl.u32 %v324, 7
        %v326 = vsub.s32 0, %v325
        %v327 = vrot.slane %v322, %v326
        %v329 = vmul.f32 %v306, %v327
        %v330 = vmul.f32 %v307, %v327
        %v331 = vmul.f32 %v308, %v327
        %v332 = vmul.f32 %v309, %v327
        %v333 = vmul.f32 %v310, %v327
        %v334 = vmul.f32 %v311, %v327
        %v335 = vmul.f32 %v312, %v327
        %v336 = vmul.f32 %v313, %v327
        %v337 = vmul.f32 %v314, %v327
        %v338 = vmul.f32 %v315, %v327
        %v339 = vmul.f32 %v316, %v327
        %v340 = vmul.f32 %v317, %v327
        %v341 = vmul.f32 %v318, %v327
        %v342 = vmul.f32 %v319, %v327
        %v343 = vmul.f32 %v320, %v327
        %v344 = vmul.f32 %v321, %v327
        %v345 = vld [vmem:[%s2] sm:$0x1]
        %v347 = vlaneseq
        %v348 = vshrl.u32 %v347, 7
        %v349 = vsub.s32 0, %v348
        %v350 = vrot.slane %v345, %v349
        %v352 = vadd.f32 %v329, %v350
        %v353 = vadd.f32 %v330, %v350
        %v354 = vadd.f32 %v331, %v350
        %v355 = vadd.f32 %v332, %v350
        %v356 = vadd.f32 %v333, %v350
        %v357 = vadd.f32 %v334, %v350
        %v358 = vadd.f32 %v335, %v350
        %v359 = vadd.f32 %v336, %v350
        %v360 = vadd.f32 %v337, %v350
        %v361 = vadd.f32 %v338, %v350
        %v362 = vadd.f32 %v339, %v350
        %v363 = vadd.f32 %v340, %v350
        %v364 = vadd.f32 %v341, %v350
        %v365 = vadd.f32 %v342, %v350
        %v366 = vadd.f32 %v343, %v350
        %v367 = vadd.f32 %v344, %v350
        %v368 = vmax.f32 %v352, 0.0
        %v369 = vmax.f32 %v353, 0.0
        %v370 = vmax.f32 %v354, 0.0
        %v371 = vmax.f32 %v355, 0.0
        %v372 = vmax.f32 %v356, 0.0
        %v373 = vmax.f32 %v357, 0.0
        %v374 = vmax.f32 %v358, 0.0
        %v375 = vmax.f32 %v359, 0.0
        %v376 = vmax.f32 %v360, 0.0
        %v377 = vmax.f32 %v361, 0.0
        %v378 = vmax.f32 %v362, 0.0
        %v379 = vmax.f32 %v363, 0.0
        %v380 = vmax.f32 %v364, 0.0
        %v381 = vmax.f32 %v365, 0.0
        %v382 = vmax.f32 %v366, 0.0
        %v383 = vmax.f32 %v367, 0.0
        %v384 = vpack.c.bf16 %v369, %v368
        %v385 = vpack.c.bf16 %v371, %v370
        %v386 = vpack.c.bf16 %v373, %v372
        %v387 = vpack.c.bf16 %v375, %v374
        %v388 = vpack.c.bf16 %v377, %v376
        %v389 = vpack.c.bf16 %v379, %v378
        %v390 = vpack.c.bf16 %v381, %v380
        %v391 = vpack.c.bf16 %v383, %v382
        %v400 = vunpack.c.l.b16 %v384
        %v401 = vunpack.c.h.b16 %v384
        %v402 = vunpack.c.l.b16 %v385
        %v403 = vunpack.c.h.b16 %v385
        %v404 = vunpack.c.l.b16 %v386
        %v405 = vunpack.c.h.b16 %v386
        %v406 = vunpack.c.l.b16 %v387
        %v407 = vunpack.c.h.b16 %v387
        %v408 = vunpack.c.l.b16 %v388
        %v409 = vunpack.c.h.b16 %v388
        %v410 = vunpack.c.l.b16 %v389
        %v411 = vunpack.c.h.b16 %v389
        %v412 = vunpack.c.l.b16 %v390
        %v413 = vunpack.c.h.b16 %v390
        %v414 = vunpack.c.l.b16 %v391
        %v415 = vunpack.c.h.b16 %v391
        %v416 = vpack.c.b16 %v400, %v400
        %v417 = vpack.c.b16 %v401, %v401
        %v418 = vpack.c.b16 %v402, %v402
        %v419 = vpack.c.b16 %v403, %v403
        %v420 = vpack.c.b16 %v404, %v404
        %v421 = vpack.c.b16 %v405, %v405
        %v422 = vpack.c.b16 %v406, %v406
        %v423 = vpack.c.b16 %v407, %v407
        %v424 = vpack.c.b16 %v408, %v408
        %v425 = vpack.c.b16 %v409, %v409
        %v426 = vpack.c.b16 %v410, %v410
        %v427 = vpack.c.b16 %v411, %v411
        %v428 = vpack.c.b16 %v412, %v412
        %v429 = vpack.c.b16 %v413, %v413
        %v430 = vpack.c.b16 %v414, %v414
        %v431 = vpack.c.b16 %v415, %v415
        %vm432 = vcmask 1040384
        %vm433 = vcmask 1044484
        %vm434 = vmor %vm432, %vm433
        %v435 = vrot.slane %v416, 7
        %v436 = vrot.slane %v435, 4
        %v437 = vrot.slane %v417, 7
        %v438 = vsel %vm434, %v436, %v437
        %v439 = vrot.slane %v437, 4
        %v440 = vrot.slane %v418, 7
        %v441 = vsel %vm434, %v439, %v440
        %v442 = vrot.slane %v440, 4
        %v443 = vrot.slane %v419, 7
        %v444 = vsel %vm434, %v442, %v443
        %v445 = vrot.slane %v443, 4
        %v446 = vrot.slane %v420, 7
        %v447 = vsel %vm434, %v445, %v446
        %v448 = vrot.slane %v446, 4
        %v449 = vrot.slane %v421, 7
        %v450 = vsel %vm434, %v448, %v449
        %v451 = vrot.slane %v449, 4
        %v452 = vrot.slane %v422, 7
        %v453 = vsel %vm434, %v451, %v452
        %v454 = vrot.slane %v452, 4
        %v455 = vrot.slane %v423, 7
        %v456 = vsel %vm434, %v454, %v455
        %v457 = vrot.slane %v455, 4
        %v458 = vrot.slane %v424, 7
        %v459 = vsel %vm434, %v457, %v458
        %v460 = vrot.slane %v458, 4
        %v461 = vrot.slane %v425, 7
        %v462 = vsel %vm434, %v460, %v461
        %v463 = vrot.slane %v461, 4
        %v464 = vrot.slane %v426, 7
        %v465 = vsel %vm434, %v463, %v464
        %v466 = vrot.slane %v464, 4
        %v467 = vrot.slane %v427, 7
        %v468 = vsel %vm434, %v466, %v467
        %v469 = vrot.slane %v467, 4
        %v470 = vrot.slane %v428, 7
        %v471 = vsel %vm434, %v469, %v470
        %v472 = vrot.slane %v470, 4
        %v473 = vrot.slane %v429, 7
        %v474 = vsel %vm434, %v472, %v473
        %v475 = vrot.slane %v473, 4
        %v476 = vrot.slane %v430, 7
        %v477 = vsel %vm434, %v475, %v476
        %v478 = vrot.slane %v476, 4
        %v479 = vrot.slane %v431, 7
        %v480 = vsel %vm434, %v478, %v479
        %v481 = vrot.slane %v479, 4
        %vm499 = vcmask 519169
        %500 = vst.msk [vmem:[#allocation2] sm:$0xe] %vm499, %v435
        %vm501 = vcmask 519168
        %502 = vst.msk [vmem:[#allocation2 + $0x4] sm:$0xf] %vm501, %v438
        %503 = vst.msk [vmem:[#allocation2 + $0x8] sm:$0xf] %vm501, %v441
        %504 = vst.msk [vmem:[#allocation2 + $0xc] sm:$0xf] %vm501, %v444
        %505 = vst.msk [vmem:[#allocation2 + $0x10] sm:$0xf] %vm501, %v447
        %506 = vst.msk [vmem:[#allocation2 + $0x14] sm:$0xf] %vm501, %v450
        %507 = vst.msk [vmem:[#allocation2 + $0x18] sm:$0xf] %vm501, %v453
        %508 = vst.msk [vmem:[#allocation2 + $0x1c] sm:$0xf] %vm501, %v456
        %509 = vst.msk [vmem:[#allocation2 + $0x20] sm:$0xf] %vm501, %v459
        %510 = vst.msk [vmem:[#allocation2 + $0x24] sm:$0xf] %vm501, %v462
        %511 = vst.msk [vmem:[#allocation2 + $0x28] sm:$0xf] %vm501, %v465
        %512 = vst.msk [vmem:[#allocation2 + $0x2c] sm:$0xf] %vm501, %v468
        %513 = vst.msk [vmem:[#allocation2 + $0x30] sm:$0xf] %vm501, %v471
        %514 = vst.msk [vmem:[#allocation2 + $0x34] sm:$0xf] %vm501, %v474
        %515 = vst.msk [vmem:[#allocation2 + $0x38] sm:$0xf] %vm501, %v477
        %516 = vst.msk [vmem:[#allocation2 + $0x3c] sm:$0xf] %vm501, %v480
        %vm517 = vcmask 516096
        %518 = vst.msk [vmem:[#allocation2 + $0x40] sm:$0x1] %vm517, %v481
        %v519 = vld [vmem:[#allocation2] sm:$0xf]
        %v520 = vld [vmem:[#allocation2 + $0x4] sm:$0xf]
        %v521 = vld [vmem:[#allocation2 + $0x8] sm:$0xf]
        %v522 = vld [vmem:[#allocation2 + $0xc] sm:$0xf]
        %v523 = vld [vmem:[#allocation2 + $0x10] sm:$0xf]
        %v524 = vld [vmem:[#allocation2 + $0x14] sm:$0xf]
        %v525 = vld [vmem:[#allocation2 + $0x18] sm:$0xf]
        %v526 = vld [vmem:[#allocation2 + $0x1c] sm:$0xf]
        %v527 = vld [vmem:[#allocation2 + $0x20] sm:$0xf]
        %v528 = vld [vmem:[#allocation2 + $0x24] sm:$0xf]
        %v529 = vld [vmem:[#allocation2 + $0x28] sm:$0xf]
        %v530 = vld [vmem:[#allocation2 + $0x2c] sm:$0xf]
        %v531 = vld [vmem:[#allocation2 + $0x30] sm:$0xf]
        %v532 = vld [vmem:[#allocation2 + $0x34] sm:$0xf]
        %v533 = vld [vmem:[#allocation2 + $0x38] sm:$0xf]
        %v534 = vld [vmem:[#allocation2 + $0x3c] sm:$0xf]
        %v535 = vld [vmem:[#allocation4] sm:$0xf]
        %v536 = vld [vmem:[#allocation4 + $0x4] sm:$0xf]
        %v537 = vld [vmem:[#allocation4 + $0x8] sm:$0xf]
        %v538 = vld [vmem:[#allocation4 + $0xc] sm:$0xf]
        %v539 = vld [vmem:[#allocation4 + $0x10] sm:$0xf]
        %v540 = vld [vmem:[#allocation4 + $0x14] sm:$0xf]
        %v541 = vld [vmem:[#allocation4 + $0x18] sm:$0xf]
        %v542 = vld [vmem:[#allocation4 + $0x1c] sm:$0xf]
        %v543 = vld [vmem:[#allocation2 + $0x40] sm:$0x1]
        %s544 = scalar_lea.vmem [#allocation4], 32
        %v545 = vld [vmem:[%s544] sm:$0xf]
        %v546 = vld [vmem:[%s544 + $0x4] sm:$0xf]
        %v547 = vld [vmem:[%s544 + $0x8] sm:$0xf]
        %v548 = vld [vmem:[%s544 + $0xc] sm:$0xf]
        %v549 = vld [vmem:[%s544 + $0x10] sm:$0xf]
        %v550 = vld [vmem:[%s544 + $0x14] sm:$0xf]
        %v551 = vld [vmem:[%s544 + $0x18] sm:$0xf]
        %v552 = vld [vmem:[%s544 + $0x1c] sm:$0xf]
        %v570 = vunpack.c.l.b16 %v519
        %v571 = vunpack.c.l.b16 %v520
        %v572 = vunpack.c.l.b16 %v521
        %v573 = vunpack.c.l.b16 %v522
        %v574 = vunpack.c.l.b16 %v523
        %v575 = vunpack.c.l.b16 %v524
        %v576 = vunpack.c.l.b16 %v525
        %v577 = vunpack.c.l.b16 %v526
        %v578 = vunpack.c.l.b16 %v527
        %v579 = vunpack.c.l.b16 %v528
        %v580 = vunpack.c.l.b16 %v529
        %v581 = vunpack.c.l.b16 %v530
        %v582 = vunpack.c.l.b16 %v531
        %v583 = vunpack.c.l.b16 %v532
        %v584 = vunpack.c.l.b16 %v533
        %v585 = vunpack.c.l.b16 %v534
        %v586 = vunpack.c.l.b16 %v543
        %v587 = vpack.c.b16 %v571, %v570
        %v588 = vpack.c.b16 %v573, %v572
        %v589 = vpack.c.b16 %v575, %v574
        %v590 = vpack.c.b16 %v577, %v576
        %v591 = vpack.c.b16 %v579, %v578
        %v592 = vpack.c.b16 %v581, %v580
        %v593 = vpack.c.b16 %v583, %v582
        %v594 = vpack.c.b16 %v585, %v584
        %v595 = vpack.c.b16 %v586, %v586
        %vm596 = vsmask.f32 7424
        %v598 = vshrl.u32 %v587, 16
        %v600 = vshll.u32 %v587, 16
        %v602 = vrot.slane %v600, 1
        %v603 = vor.u32 %v598, %v602
        %v605 = vshll.u32 %v588, 16
        %v607 = vrot.slane %v605, 1
        %v608 = vsel %vm596, %v603, %v607
        %v609 = vshrl.u32 %v588, 16
        %v611 = vor.u32 %v609, %v607
        %v613 = vshll.u32 %v589, 16
        %v615 = vrot.slane %v613, 1
        %v616 = vsel %vm596, %v611, %v615
        %v617 = vshrl.u32 %v589, 16
        %v619 = vor.u32 %v617, %v615
        %v621 = vshll.u32 %v590, 16
        %v623 = vrot.slane %v621, 1
        %v624 = vsel %vm596, %v619, %v623
        %v625 = vshrl.u32 %v590, 16
        %v627 = vor.u32 %v625, %v623
        %v629 = vshll.u32 %v591, 16
        %v631 = vrot.slane %v629, 1
        %v632 = vsel %vm596, %v627, %v631
        %v633 = vshrl.u32 %v591, 16
        %v635 = vor.u32 %v633, %v631
        %v637 = vshll.u32 %v592, 16
        %v639 = vrot.slane %v637, 1
        %v640 = vsel %vm596, %v635, %v639
        %v641 = vshrl.u32 %v592, 16
        %v643 = vor.u32 %v641, %v639
        %v645 = vshll.u32 %v593, 16
        %v647 = vrot.slane %v645, 1
        %v648 = vsel %vm596, %v643, %v647
        %v649 = vshrl.u32 %v593, 16
        %v651 = vor.u32 %v649, %v647
        %v653 = vshll.u32 %v594, 16
        %v655 = vrot.slane %v653, 1
        %v656 = vsel %vm596, %v651, %v655
        %v657 = vshrl.u32 %v594, 16
        %v659 = vor.u32 %v657, %v655
        %v661 = vshll.u32 %v595, 16
        %v663 = vrot.slane %v661, 1
        %v664 = vsel %vm596, %v659, %v663
        %v673 = vunpack.c.l.b16 %v545
        %v674 = vunpack.c.l.b16 %v546
        %v675 = vunpack.c.l.b16 %v547
        %v676 = vunpack.c.l.b16 %v548
        %v677 = vunpack.c.l.b16 %v549
        %v678 = vunpack.c.l.b16 %v550
        %v679 = vunpack.c.l.b16 %v551
        %v680 = vunpack.c.l.b16 %v552
        %v681 = vpack.c.b16 %v674, %v673
        %v682 = vpack.c.b16 %v676, %v675
        %v683 = vpack.c.b16 %v678, %v677
        %v684 = vpack.c.b16 %v680, %v679
        %vm689 = vcmask 523264
        %v691 = vsel %vm689, %v608, 0
        %v694 = vsel %vm689, %v616, 0
        %v697 = vsel %vm689, %v624, 0
        %v700 = vsel %vm689, %v632, 0
        %v703 = vsel %vm689, %v640, 0
        %v706 = vsel %vm689, %v648, 0
        %v709 = vsel %vm689, %v656, 0
        %v712 = vsel %vm689, %v664, 0
        %714 = vmatprep.subr.bf16.mxu0 0
        %715 = vmatpush1.bf16.msra.mxu0 0
        %716 = vmatprep.subr.bf16.mxu0 0
        %717 = vmatpush1.bf16.msra.mxu0 0
        %718 = vmatprep.subr.bf16.mxu0 0
        %719 = vmatpush1.bf16.msra.mxu0 0
        %720 = vmatprep.subr.bf16.mxu0 0
        %721 = vmatpush1.bf16.msra.mxu0 0
        %722 = vmatprep.subr.bf16.mxu0 0
        %723 = vmatpush1.bf16.msra.mxu0 %v684
        %724 = vmatprep.subr.bf16.mxu0 0
        %725 = vmatpush1.bf16.msra.mxu0 %v683
        %726 = vmatprep.subr.bf16.mxu0 0
        %727 = vmatpush1.bf16.msra.mxu0 %v682
        %728 = vmatprep.subr.bf16.mxu0 0
        %729 = vmatpush1.bf16.msra.mxu0 %v681
        %730 = vmatprep.subr.bf16.mxu0 0
        %731 = vmatpush2.bf16.msra.mxu0 0
        %732 = vmatprep.subr.bf16.mxu0 0
        %733 = vmatpush2.bf16.msra.mxu0 0
        %734 = vmatprep.subr.bf16.mxu0 0
        %735 = vmatpush2.bf16.msra.mxu0 0
        %736 = vmatprep.subr.bf16.mxu0 0
        %737 = vmatpush2.bf16.msra.mxu0 0
        %738 = vmatprep.subr.bf16.mxu0 0
        %739 = vmatpush2.bf16.msra.mxu0 0
        %740 = vmatprep.subr.bf16.mxu0 0
        %741 = vmatpush2.bf16.msra.mxu0 0
        %742 = vmatprep.subr.bf16.mxu0 0
        %743 = vmatpush2.bf16.msra.mxu0 0
        %744 = vmatprep.subr.bf16.mxu0 0
        %745 = vmatpush2.bf16.msra.mxu0 0
        %746 = vmatprep.mubr.bf16.mxu0 0
        %747 = vmatmul.mubr.bf16.gmra.mxu0 %v691
        %v748 = vpop.f32.mrf.mxu0
        %v749 = vadd.f32 0.0, %v748
        %v750 = vpop.f32.mrf.mxu0
        %v751 = vpop.f32.mrf.mxu0
        %v752 = vadd.f32 0.0, %v751
        %v753 = vpop.f32.mrf.mxu0
        %754 = vmatprep.mubr.bf16.mxu0 0
        %755 = vmatmul.mubr.bf16.gmra.mxu0 %v694
        %v756 = vpop.f32.mrf.mxu0
        %v757 = vadd.f32 0.0, %v756
        %v758 = vpop.f32.mrf.mxu0
        %v759 = vpop.f32.mrf.mxu0
        %v760 = vadd.f32 0.0, %v759
        %v761 = vpop.f32.mrf.mxu0
        %762 = vmatprep.mubr.bf16.mxu0 0
        %763 = vmatmul.mubr.bf16.gmra.mxu0 %v697
        %v764 = vpop.f32.mrf.mxu0
        %v765 = vadd.f32 0.0, %v764
        %v766 = vpop.f32.mrf.mxu0
        %v767 = vpop.f32.mrf.mxu0
        %v768 = vadd.f32 0.0, %v767
        %v769 = vpop.f32.mrf.mxu0
        %770 = vmatprep.mubr.bf16.mxu0 0
        %771 = vmatmul.mubr.bf16.gmra.mxu0 %v700
        %v772 = vpop.f32.mrf.mxu0
        %v773 = vadd.f32 0.0, %v772
        %v774 = vpop.f32.mrf.mxu0
        %v775 = vpop.f32.mrf.mxu0
        %v776 = vadd.f32 0.0, %v775
        %v777 = vpop.f32.mrf.mxu0
        %778 = vmatprep.mubr.bf16.mxu0 0
        %779 = vmatmul.mubr.bf16.gmra.mxu0 %v703
        %v780 = vpop.f32.mrf.mxu0
        %v781 = vadd.f32 0.0, %v780
        %v782 = vpop.f32.mrf.mxu0
        %v783 = vpop.f32.mrf.mxu0
        %v784 = vadd.f32 0.0, %v783
        %v785 = vpop.f32.mrf.mxu0
        %786 = vmatprep.mubr.bf16.mxu0 0
        %787 = vmatmul.mubr.bf16.gmra.mxu0 %v706
        %v788 = vpop.f32.mrf.mxu0
        %v789 = vadd.f32 0.0, %v788
        %v790 = vpop.f32.mrf.mxu0
        %v791 = vpop.f32.mrf.mxu0
        %v792 = vadd.f32 0.0, %v791
        %v793 = vpop.f32.mrf.mxu0
        %794 = vmatprep.mubr.bf16.mxu0 0
        %795 = vmatmul.mubr.bf16.gmra.mxu0 %v709
        %v796 = vpop.f32.mrf.mxu0
        %v797 = vadd.f32 0.0, %v796
        %v798 = vpop.f32.mrf.mxu0
        %v799 = vpop.f32.mrf.mxu0
        %v800 = vadd.f32 0.0, %v799
        %v801 = vpop.f32.mrf.mxu0
        %802 = vmatprep.mubr.bf16.mxu0 0
        %803 = vmatmul.mubr.bf16.gmra.mxu0 %v712
        %v804 = vpop.f32.mrf.mxu0
        %v805 = vadd.f32 0.0, %v804
        %v806 = vpop.f32.mrf.mxu0
        %v807 = vpop.f32.mrf.mxu0
        %v808 = vadd.f32 0.0, %v807
        %v809 = vpop.f32.mrf.mxu0
        %810 = vdwg.mxu0
        %v819 = vunpack.c.l.b16 %v535
        %v820 = vunpack.c.l.b16 %v536
        %v821 = vunpack.c.l.b16 %v537
        %v822 = vunpack.c.l.b16 %v538
        %v823 = vunpack.c.l.b16 %v539
        %v824 = vunpack.c.l.b16 %v540
        %v825 = vunpack.c.l.b16 %v541
        %v826 = vunpack.c.l.b16 %v542
        %v827 = vpack.c.b16 %v820, %v819
        %v828 = vpack.c.b16 %v822, %v821
        %v829 = vpack.c.b16 %v824, %v823
        %v830 = vpack.c.b16 %v826, %v825
        %v835 = vsel %vm689, %v587, 0
        %v837 = vsel %vm689, %v588, 0
        %v839 = vsel %vm689, %v589, 0
        %v841 = vsel %vm689, %v590, 0
        %v843 = vsel %vm689, %v591, 0
        %v845 = vsel %vm689, %v592, 0
        %v847 = vsel %vm689, %v593, 0
        %v849 = vsel %vm689, %v594, 0
        %851 = vmatprep.subr.bf16.mxu0 0
        %852 = vmatpush1.bf16.msra.mxu0 0
        %853 = vmatprep.subr.bf16.mxu0 0
        %854 = vmatpush1.bf16.msra.mxu0 0
        %855 = vmatprep.subr.bf16.mxu0 0
        %856 = vmatpush1.bf16.msra.mxu0 0
        %857 = vmatprep.subr.bf16.mxu0 0
        %858 = vmatpush1.bf16.msra.mxu0 0
        %859 = vmatprep.subr.bf16.mxu0 0
        %860 = vmatpush1.bf16.msra.mxu0 %v830
        %861 = vmatprep.subr.bf16.mxu0 0
        %862 = vmatpush1.bf16.msra.mxu0 %v829
        %863 = vmatprep.subr.bf16.mxu0 0
        %864 = vmatpush1.bf16.msra.mxu0 %v828
        %865 = vmatprep.subr.bf16.mxu0 0
        %866 = vmatpush1.bf16.msra.mxu0 %v827
        %867 = vmatprep.subr.bf16.mxu0 0
        %868 = vmatpush2.bf16.msra.mxu0 0
        %869 = vmatprep.subr.bf16.mxu0 0
        %870 = vmatpush2.bf16.msra.mxu0 0
        %871 = vmatprep.subr.bf16.mxu0 0
        %872 = vmatpush2.bf16.msra.mxu0 0
        %873 = vmatprep.subr.bf16.mxu0 0
        %874 = vmatpush2.bf16.msra.mxu0 0
        %875 = vmatprep.subr.bf16.mxu0 0
        %876 = vmatpush2.bf16.msra.mxu0 0
        %877 = vmatprep.subr.bf16.mxu0 0
        %878 = vmatpush2.bf16.msra.mxu0 0
        %879 = vmatprep.subr.bf16.mxu0 0
        %880 = vmatpush2.bf16.msra.mxu0 0
        %881 = vmatprep.subr.bf16.mxu0 0
        %882 = vmatpush2.bf16.msra.mxu0 0
        %883 = vmatprep.mubr.bf16.mxu0 0
        %884 = vmatmul.mubr.bf16.gmra.mxu0 %v835
        %v885 = vpop.f32.mrf.mxu0
        %v886 = vadd.f32 %v749, %v885
        %v887 = vpop.f32.mrf.mxu0
        %v888 = vpop.f32.mrf.mxu0
        %v889 = vadd.f32 %v752, %v888
        %v890 = vpop.f32.mrf.mxu0
        %891 = vmatprep.mubr.bf16.mxu0 0
        %892 = vmatmul.mubr.bf16.gmra.mxu0 %v837
        %v893 = vpop.f32.mrf.mxu0
        %v894 = vadd.f32 %v757, %v893
        %v895 = vpop.f32.mrf.mxu0
        %v896 = vpop.f32.mrf.mxu0
        %v897 = vadd.f32 %v760, %v896
        %v898 = vpop.f32.mrf.mxu0
        %899 = vmatprep.mubr.bf16.mxu0 0
        %900 = vmatmul.mubr.bf16.gmra.mxu0 %v839
        %v901 = vpop.f32.mrf.mxu0
        %v902 = vadd.f32 %v765, %v901
        %v903 = vpop.f32.mrf.mxu0
        %v904 = vpop.f32.mrf.mxu0
        %v905 = vadd.f32 %v768, %v904
        %v906 = vpop.f32.mrf.mxu0
        %907 = vmatprep.mubr.bf16.mxu0 0
        %908 = vmatmul.mubr.bf16.gmra.mxu0 %v841
        %v909 = vpop.f32.mrf.mxu0
        %v910 = vadd.f32 %v773, %v909
        %v911 = vpop.f32.mrf.mxu0
        %v912 = vpop.f32.mrf.mxu0
        %v913 = vadd.f32 %v776, %v912
        %v914 = vpop.f32.mrf.mxu0
        %915 = vmatprep.mubr.bf16.mxu0 0
        %916 = vmatmul.mubr.bf16.gmra.mxu0 %v843
        %v917 = vpop.f32.mrf.mxu0
        %v918 = vadd.f32 %v781, %v917
        %v919 = vpop.f32.mrf.mxu0
        %v920 = vpop.f32.mrf.mxu0
        %v921 = vadd.f32 %v784, %v920
        %v922 = vpop.f32.mrf.mxu0
        %923 = vmatprep.mubr.bf16.mxu0 0
        %924 = vmatmul.mubr.bf16.gmra.mxu0 %v845
        %v925 = vpop.f32.mrf.mxu0
        %v926 = vadd.f32 %v789, %v925
        %v927 = vpop.f32.mrf.mxu0
        %v928 = vpop.f32.mrf.mxu0
        %v929 = vadd.f32 %v792, %v928
        %v930 = vpop.f32.mrf.mxu0
        %931 = vmatprep.mubr.bf16.mxu0 0
        %932 = vmatmul.mubr.bf16.gmra.mxu0 %v847
        %v933 = vpop.f32.mrf.mxu0
        %v934 = vadd.f32 %v797, %v933
        %v935 = vpop.f32.mrf.mxu0
        %v936 = vpop.f32.mrf.mxu0
        %v937 = vadd.f32 %v800, %v936
        %v938 = vpop.f32.mrf.mxu0
        %939 = vmatprep.mubr.bf16.mxu0 0
        %940 = vmatmul.mubr.bf16.gmra.mxu0 %v849
        %v941 = vpop.f32.mrf.mxu0
        %v942 = vadd.f32 %v805, %v941
        %v943 = vpop.f32.mrf.mxu0
        %v944 = vpop.f32.mrf.mxu0
        %v945 = vadd.f32 %v808, %v944
        %v946 = vpop.f32.mrf.mxu0
        %947 = vdwg.mxu0
        %v948 = vld [vmem:[#allocation2] sm:$0xe]
        %s949 = scalar_lea.vmem [#allocation4], 64
        %v950 = vld [vmem:[%s949] sm:$0xf]
        %v951 = vld [vmem:[%s949 + $0x4] sm:$0xf]
        %v952 = vld [vmem:[%s949 + $0x8] sm:$0xf]
        %v953 = vld [vmem:[%s949 + $0xc] sm:$0xf]
        %v954 = vld [vmem:[%s949 + $0x10] sm:$0xf]
        %v955 = vld [vmem:[%s949 + $0x14] sm:$0xf]
        %v956 = vld [vmem:[%s949 + $0x18] sm:$0xf]
        %v957 = vld [vmem:[%s949 + $0x1c] sm:$0xf]
        %v959 = vunpack.c.l.b16 %v948
        %v960 = vpack.c.b16 %v571, %v959
        %vm961 = vcmask 1046528
        %v962 = vrot.slane %v960, 1
        %v963 = vrot.slane %v588, 1
        %v964 = vsel %vm961, %v962, %v963
        %v965 = vrot.slane %v589, 1
        %v966 = vsel %vm961, %v963, %v965
        %v967 = vrot.slane %v590, 1
        %v968 = vsel %vm961, %v965, %v967
        %v969 = vrot.slane %v591, 1
        %v970 = vsel %vm961, %v967, %v969
        %v971 = vrot.slane %v592, 1
        %v972 = vsel %vm961, %v969, %v971
        %v973 = vrot.slane %v593, 1
        %v974 = vsel %vm961, %v971, %v973
        %v975 = vrot.slane %v594, 1
        %v976 = vsel %vm961, %v973, %v975
        %v977 = vrot.slane %v595, 1
        %v978 = vsel %vm961, %v975, %v977
        %v987 = vunpack.c.l.b16 %v950
        %v988 = vunpack.c.l.b16 %v951
        %v989 = vunpack.c.l.b16 %v952
        %v990 = vunpack.c.l.b16 %v953
        %v991 = vunpack.c.l.b16 %v954
        %v992 = vunpack.c.l.b16 %v955
        %v993 = vunpack.c.l.b16 %v956
        %v994 = vunpack.c.l.b16 %v957
        %v995 = vpack.c.b16 %v988, %v987
        %v996 = vpack.c.b16 %v990, %v989
        %v997 = vpack.c.b16 %v992, %v991
        %v998 = vpack.c.b16 %v994, %v993
        %v1004 = vsel %vm689, %v964, 0
        %v1007 = vsel %vm689, %v966, 0
        %v1010 = vsel %vm689, %v968, 0
        %v1013 = vsel %vm689, %v970, 0
        %v1016 = vsel %vm689, %v972, 0
        %v1019 = vsel %vm689, %v974, 0
        %v1022 = vsel %vm689, %v976, 0
        %v1025 = vsel %vm689, %v978, 0
        %1027 = vmatprep.subr.bf16.mxu0 0
        %1028 = vmatpush1.bf16.msra.mxu0 0
        %1029 = vmatprep.subr.bf16.mxu0 0
        %1030 = vmatpush1.bf16.msra.mxu0 0
        %1031 = vmatprep.subr.bf16.mxu0 0
        %1032 = vmatpush1.bf16.msra.mxu0 0
        %1033 = vmatprep.subr.bf16.mxu0 0
        %1034 = vmatpush1.bf16.msra.mxu0 0
        %1035 = vmatprep.subr.bf16.mxu0 0
        %1036 = vmatpush1.bf16.msra.mxu0 %v998
        %1037 = vmatprep.subr.bf16.mxu0 0
        %1038 = vmatpush1.bf16.msra.mxu0 %v997
        %1039 = vmatprep.subr.bf16.mxu0 0
        %1040 = vmatpush1.bf16.msra.mxu0 %v996
        %1041 = vmatprep.subr.bf16.mxu0 0
        %1042 = vmatpush1.bf16.msra.mxu0 %v995
        %1043 = vmatprep.subr.bf16.mxu0 0
        %1044 = vmatpush2.bf16.msra.mxu0 0
        %1045 = vmatprep.subr.bf16.mxu0 0
        %1046 = vmatpush2.bf16.msra.mxu0 0
        %1047 = vmatprep.subr.bf16.mxu0 0
        %1048 = vmatpush2.bf16.msra.mxu0 0
        %1049 = vmatprep.subr.bf16.mxu0 0
        %1050 = vmatpush2.bf16.msra.mxu0 0
        %1051 = vmatprep.subr.bf16.mxu0 0
        %1052 = vmatpush2.bf16.msra.mxu0 0
        %1053 = vmatprep.subr.bf16.mxu0 0
        %1054 = vmatpush2.bf16.msra.mxu0 0
        %1055 = vmatprep.subr.bf16.mxu0 0
        %1056 = vmatpush2.bf16.msra.mxu0 0
        %1057 = vmatprep.subr.bf16.mxu0 0
        %1058 = vmatpush2.bf16.msra.mxu0 0
        %1059 = vmatprep.mubr.bf16.mxu0 0
        %1060 = vmatmul.mubr.bf16.gmra.mxu0 %v1004
        %v1061 = vpop.f32.mrf.mxu0
        %v1062 = vadd.f32 0.0, %v1061
        %v1063 = vpop.f32.mrf.mxu0
        %v1064 = vpop.f32.mrf.mxu0
        %v1065 = vadd.f32 0.0, %v1064
        %v1066 = vpop.f32.mrf.mxu0
        %1067 = vmatprep.mubr.bf16.mxu0 0
        %1068 = vmatmul.mubr.bf16.gmra.mxu0 %v1007
        %v1069 = vpop.f32.mrf.mxu0
        %v1070 = vadd.f32 0.0, %v1069
        %v1071 = vpop.f32.mrf.mxu0
        %v1072 = vpop.f32.mrf.mxu0
        %v1073 = vadd.f32 0.0, %v1072
        %v1074 = vpop.f32.mrf.mxu0
        %1075 = vmatprep.mubr.bf16.mxu0 0
        %1076 = vmatmul.mubr.bf16.gmra.mxu0 %v1010
        %v1077 = vpop.f32.mrf.mxu0
        %v1078 = vadd.f32 0.0, %v1077
        %v1079 = vpop.f32.mrf.mxu0
        %v1080 = vpop.f32.mrf.mxu0
        %v1081 = vadd.f32 0.0, %v1080
        %v1082 = vpop.f32.mrf.mxu0
        %1083 = vmatprep.mubr.bf16.mxu0 0
        %1084 = vmatmul.mubr.bf16.gmra.mxu0 %v1013
        %v1085 = vpop.f32.mrf.mxu0
        %v1086 = vadd.f32 0.0, %v1085
        %v1087 = vpop.f32.mrf.mxu0
        %v1088 = vpop.f32.mrf.mxu0
        %v1089 = vadd.f32 0.0, %v1088
        %v1090 = vpop.f32.mrf.mxu0
        %1091 = vmatprep.mubr.bf16.mxu0 0
        %1092 = vmatmul.mubr.bf16.gmra.mxu0 %v1016
        %v1093 = vpop.f32.mrf.mxu0
        %v1094 = vadd.f32 0.0, %v1093
        %v1095 = vpop.f32.mrf.mxu0
        %v1096 = vpop.f32.mrf.mxu0
        %v1097 = vadd.f32 0.0, %v1096
        %v1098 = vpop.f32.mrf.mxu0
        %1099 = vmatprep.mubr.bf16.mxu0 0
        %1100 = vmatmul.mubr.bf16.gmra.mxu0 %v1019
        %v1101 = vpop.f32.mrf.mxu0
        %v1102 = vadd.f32 0.0, %v1101
        %v1103 = vpop.f32.mrf.mxu0
        %v1104 = vpop.f32.mrf.mxu0
        %v1105 = vadd.f32 0.0, %v1104
        %v1106 = vpop.f32.mrf.mxu0
        %1107 = vmatprep.mubr.bf16.mxu0 0
        %1108 = vmatmul.mubr.bf16.gmra.mxu0 %v1022
        %v1109 = vpop.f32.mrf.mxu0
        %v1110 = vadd.f32 0.0, %v1109
        %v1111 = vpop.f32.mrf.mxu0
        %v1112 = vpop.f32.mrf.mxu0
        %v1113 = vadd.f32 0.0, %v1112
        %v1114 = vpop.f32.mrf.mxu0
        %1115 = vmatprep.mubr.bf16.mxu0 0
        %1116 = vmatmul.mubr.bf16.gmra.mxu0 %v1025
        %v1117 = vpop.f32.mrf.mxu0
        %v1118 = vadd.f32 0.0, %v1117
        %v1119 = vpop.f32.mrf.mxu0
        %v1120 = vpop.f32.mrf.mxu0
        %v1121 = vadd.f32 0.0, %v1120
        %v1122 = vpop.f32.mrf.mxu0
        %1123 = vdwg.mxu0
        %v1124 = vadd.f32 %v886, %v1062
        %v1125 = vadd.f32 %v889, %v1065
        %v1126 = vadd.f32 %v894, %v1070
        %v1127 = vadd.f32 %v897, %v1073
        %v1128 = vadd.f32 %v902, %v1078
        %v1129 = vadd.f32 %v905, %v1081
        %v1130 = vadd.f32 %v910, %v1086
        %v1131 = vadd.f32 %v913, %v1089
        %v1132 = vadd.f32 %v918, %v1094
        %v1133 = vadd.f32 %v921, %v1097
        %v1134 = vadd.f32 %v926, %v1102
        %v1135 = vadd.f32 %v929, %v1105
        %v1136 = vadd.f32 %v934, %v1110
        %v1137 = vadd.f32 %v937, %v1113
        %v1138 = vadd.f32 %v942, %v1118
        %v1139 = vadd.f32 %v945, %v1121
        %v1140 = vld [vmem:[#allocation2 + $0x40] sm:$0x3]
        %s1141 = scalar_lea.vmem [#allocation4], 96
        %v1142 = vld [vmem:[%s1141] sm:$0xf]
        %v1143 = vld [vmem:[%s1141 + $0x4] sm:$0xf]
        %v1144 = vld [vmem:[%s1141 + $0x8] sm:$0xf]
        %v1145 = vld [vmem:[%s1141 + $0xc] sm:$0xf]
        %v1146 = vld [vmem:[%s1141 + $0x10] sm:$0xf]
        %v1147 = vld [vmem:[%s1141 + $0x14] sm:$0xf]
        %v1148 = vld [vmem:[%s1141 + $0x18] sm:$0xf]
        %v1149 = vld [vmem:[%s1141 + $0x1c] sm:$0xf]
        %v1151 = vunpack.c.l.b16 %v1140
        %v1152 = vpack.c.b16 %v1151, %v1151
        %vm1153 = vsmask.f32 6400
        %v1155 = vshrl.u32 %v960, 16
        %v1157 = vrot.slane %v1155, 1
        %v1158 = vshll.u32 %v960, 16
        %v1160 = vrot.slane %v1158, 2
        %v1161 = vor.u32 %v1157, %v1160
        %v1162 = vrot.slane %v609, 1
        %v1163 = vrot.slane %v605, 2
        %v1164 = vor.u32 %v1162, %v1163
        %v1165 = vsel %vm1153, %v1161, %v1164
        %v1166 = vrot.slane %v617, 1
        %v1167 = vrot.slane %v613, 2
        %v1168 = vor.u32 %v1166, %v1167
        %v1169 = vsel %vm1153, %v1164, %v1168
        %v1170 = vrot.slane %v625, 1
        %v1171 = vrot.slane %v621, 2
        %v1172 = vor.u32 %v1170, %v1171
        %v1173 = vsel %vm1153, %v1168, %v1172
        %v1174 = vrot.slane %v633, 1
        %v1175 = vrot.slane %v629, 2
        %v1176 = vor.u32 %v1174, %v1175
        %v1177 = vsel %vm1153, %v1172, %v1176
        %v1178 = vrot.slane %v641, 1
        %v1179 = vrot.slane %v637, 2
        %v1180 = vor.u32 %v1178, %v1179
        %v1181 = vsel %vm1153, %v1176, %v1180
        %v1182 = vrot.slane %v649, 1
        %v1183 = vrot.slane %v645, 2
        %v1184 = vor.u32 %v1182, %v1183
        %v1185 = vsel %vm1153, %v1180, %v1184
        %v1186 = vrot.slane %v657, 1
        %v1187 = vrot.slane %v653, 2
        %v1188 = vor.u32 %v1186, %v1187
        %v1189 = vsel %vm1153, %v1184, %v1188
        %v1191 = vshrl.u32 %v1152, 16
        %v1193 = vrot.slane %v1191, 1
        %v1194 = vshll.u32 %v1152, 16
        %v1196 = vrot.slane %v1194, 2
        %v1197 = vor.u32 %v1193, %v1196
        %v1198 = vsel %vm1153, %v1188, %v1197
        %v1207 = vunpack.c.l.b16 %v1142
        %v1208 = vunpack.c.l.b16 %v1143
        %v1209 = vunpack.c.l.b16 %v1144
        %v1210 = vunpack.c.l.b16 %v1145
        %v1211 = vunpack.c.l.b16 %v1146
        %v1212 = vunpack.c.l.b16 %v1147
        %v1213 = vunpack.c.l.b16 %v1148
        %v1214 = vunpack.c.l.b16 %v1149
        %v1215 = vpack.c.b16 %v1208, %v1207
        %v1216 = vpack.c.b16 %v1210, %v1209
        %v1217 = vpack.c.b16 %v1212, %v1211
        %v1218 = vpack.c.b16 %v1214, %v1213
        %v1224 = vsel %vm689, %v1165, 0
        %v1227 = vsel %vm689, %v1169, 0
        %v1230 = vsel %vm689, %v1173, 0
        %v1233 = vsel %vm689, %v1177, 0
        %v1236 = vsel %vm689, %v1181, 0
        %v1239 = vsel %vm689, %v1185, 0
        %v1242 = vsel %vm689, %v1189, 0
        %v1245 = vsel %vm689, %v1198, 0
        %1247 = vmatprep.subr.bf16.mxu0 0
        %1248 = vmatpush1.bf16.msra.mxu0 0
        %1249 = vmatprep.subr.bf16.mxu0 0
        %1250 = vmatpush1.bf16.msra.mxu0 0
        %1251 = vmatprep.subr.bf16.mxu0 0
        %1252 = vmatpush1.bf16.msra.mxu0 0
        %1253 = vmatprep.subr.bf16.mxu0 0
        %1254 = vmatpush1.bf16.msra.mxu0 0
        %1255 = vmatprep.subr.bf16.mxu0 0
        %1256 = vmatpush1.bf16.msra.mxu0 %v1218
        %1257 = vmatprep.subr.bf16.mxu0 0
        %1258 = vmatpush1.bf16.msra.mxu0 %v1217
        %1259 = vmatprep.subr.bf16.mxu0 0
        %1260 = vmatpush1.bf16.msra.mxu0 %v1216
        %1261 = vmatprep.subr.bf16.mxu0 0
        %1262 = vmatpush1.bf16.msra.mxu0 %v1215
        %1263 = vmatprep.subr.bf16.mxu0 0
        %1264 = vmatpush2.bf16.msra.mxu0 0
        %1265 = vmatprep.subr.bf16.mxu0 0
        %1266 = vmatpush2.bf16.msra.mxu0 0
        %1267 = vmatprep.subr.bf16.mxu0 0
        %1268 = vmatpush2.bf16.msra.mxu0 0
        %1269 = vmatprep.subr.bf16.mxu0 0
        %1270 = vmatpush2.bf16.msra.mxu0 0
        %1271 = vmatprep.subr.bf16.mxu0 0
        %1272 = vmatpush2.bf16.msra.mxu0 0
        %1273 = vmatprep.subr.bf16.mxu0 0
        %1274 = vmatpush2.bf16.msra.mxu0 0
        %1275 = vmatprep.subr.bf16.mxu0 0
        %1276 = vmatpush2.bf16.msra.mxu0 0
        %1277 = vmatprep.subr.bf16.mxu0 0
        %1278 = vmatpush2.bf16.msra.mxu0 0
        %1279 = vmatprep.mubr.bf16.mxu0 0
        %1280 = vmatmul.mubr.bf16.gmra.mxu0 %v1224
        %v1281 = vpop.f32.mrf.mxu0
        %v1282 = vadd.f32 0.0, %v1281
        %v1283 = vpop.f32.mrf.mxu0
        %v1284 = vpop.f32.mrf.mxu0
        %v1285 = vadd.f32 0.0, %v1284
        %v1286 = vpop.f32.mrf.mxu0
        %1287 = vmatprep.mubr.bf16.mxu0 0
        %1288 = vmatmul.mubr.bf16.gmra.mxu0 %v1227
        %v1289 = vpop.f32.mrf.mxu0
        %v1290 = vadd.f32 0.0, %v1289
        %v1291 = vpop.f32.mrf.mxu0
        %v1292 = vpop.f32.mrf.mxu0
        %v1293 = vadd.f32 0.0, %v1292
        %v1294 = vpop.f32.mrf.mxu0
        %1295 = vmatprep.mubr.bf16.mxu0 0
        %1296 = vmatmul.mubr.bf16.gmra.mxu0 %v1230
        %v1297 = vpop.f32.mrf.mxu0
        %v1298 = vadd.f32 0.0, %v1297
        %v1299 = vpop.f32.mrf.mxu0
        %v1300 = vpop.f32.mrf.mxu0
        %v1301 = vadd.f32 0.0, %v1300
        %v1302 = vpop.f32.mrf.mxu0
        %1303 = vmatprep.mubr.bf16.mxu0 0
        %1304 = vmatmul.mubr.bf16.gmra.mxu0 %v1233
        %v1305 = vpop.f32.mrf.mxu0
        %v1306 = vadd.f32 0.0, %v1305
        %v1307 = vpop.f32.mrf.mxu0
        %v1308 = vpop.f32.mrf.mxu0
        %v1309 = vadd.f32 0.0, %v1308
        %v1310 = vpop.f32.mrf.mxu0
        %1311 = vmatprep.mubr.bf16.mxu0 0
        %1312 = vmatmul.mubr.bf16.gmra.mxu0 %v1236
        %v1313 = vpop.f32.mrf.mxu0
        %v1314 = vadd.f32 0.0, %v1313
        %v1315 = vpop.f32.mrf.mxu0
        %v1316 = vpop.f32.mrf.mxu0
        %v1317 = vadd.f32 0.0, %v1316
        %v1318 = vpop.f32.mrf.mxu0
        %1319 = vmatprep.mubr.bf16.mxu0 0
        %1320 = vmatmul.mubr.bf16.gmra.mxu0 %v1239
        %v1321 = vpop.f32.mrf.mxu0
        %v1322 = vadd.f32 0.0, %v1321
        %v1323 = vpop.f32.mrf.mxu0
        %v1324 = vpop.f32.mrf.mxu0
        %v1325 = vadd.f32 0.0, %v1324
        %v1326 = vpop.f32.mrf.mxu0
        %1327 = vmatprep.mubr.bf16.mxu0 0
        %1328 = vmatmul.mubr.bf16.gmra.mxu0 %v1242
        %v1329 = vpop.f32.mrf.mxu0
        %v1330 = vadd.f32 0.0, %v1329
        %v1331 = vpop.f32.mrf.mxu0
        %v1332 = vpop.f32.mrf.mxu0
        %v1333 = vadd.f32 0.0, %v1332
        %v1334 = vpop.f32.mrf.mxu0
        %1335 = vmatprep.mubr.bf16.mxu0 0
        %1336 = vmatmul.mubr.bf16.gmra.mxu0 %v1245
        %v1337 = vpop.f32.mrf.mxu0
        %v1338 = vadd.f32 0.0, %v1337
        %v1339 = vpop.f32.mrf.mxu0
        %v1340 = vpop.f32.mrf.mxu0
        %v1341 = vadd.f32 0.0, %v1340
        %v1342 = vpop.f32.mrf.mxu0
        %1343 = vdwg.mxu0
        %v1344 = vadd.f32 %v1124, %v1282
        %v1345 = vadd.f32 %v1125, %v1285
        %v1346 = vadd.f32 %v1126, %v1290
        %v1347 = vadd.f32 %v1127, %v1293
        %v1348 = vadd.f32 %v1128, %v1298
        %v1349 = vadd.f32 %v1129, %v1301
        %v1350 = vadd.f32 %v1130, %v1306
        %v1351 = vadd.f32 %v1131, %v1309
        %v1352 = vadd.f32 %v1132, %v1314
        %v1353 = vadd.f32 %v1133, %v1317
        %v1354 = vadd.f32 %v1134, %v1322
        %v1355 = vadd.f32 %v1135, %v1325
        %v1356 = vadd.f32 %v1136, %v1330
        %v1357 = vadd.f32 %v1137, %v1333
        %v1358 = vadd.f32 %v1138, %v1338
        %v1359 = vadd.f32 %v1139, %v1341
        %v1360 = vld [vmem:[#allocation2] sm:$0xc]
        %s1361 = scalar_lea.vmem [#allocation4], 128
        %v1362 = vld [vmem:[%s1361] sm:$0xf]
        %v1363 = vld [vmem:[%s1361 + $0x4] sm:$0xf]
        %v1364 = vld [vmem:[%s1361 + $0x8] sm:$0xf]
        %v1365 = vld [vmem:[%s1361 + $0xc] sm:$0xf]
        %v1366 = vld [vmem:[%s1361 + $0x10] sm:$0xf]
        %v1367 = vld [vmem:[%s1361 + $0x14] sm:$0xf]
        %v1368 = vld [vmem:[%s1361 + $0x18] sm:$0xf]
        %v1369 = vld [vmem:[%s1361 + $0x1c] sm:$0xf]
        %v1371 = vunpack.c.l.b16 %v1360
        %v1372 = vpack.c.b16 %v571, %v1371
        %vm1373 = vcmask 1045504
        %v1374 = vrot.slane %v1372, 2
        %v1375 = vrot.slane %v588, 2
        %v1376 = vsel %vm1373, %v1374, %v1375
        %v1377 = vrot.slane %v589, 2
        %v1378 = vsel %vm1373, %v1375, %v1377
        %v1379 = vrot.slane %v590, 2
        %v1380 = vsel %vm1373, %v1377, %v1379
        %v1381 = vrot.slane %v591, 2
        %v1382 = vsel %vm1373, %v1379, %v1381
        %v1383 = vrot.slane %v592, 2
        %v1384 = vsel %vm1373, %v1381, %v1383
        %v1385 = vrot.slane %v593, 2
        %v1386 = vsel %vm1373, %v1383, %v1385
        %v1387 = vrot.slane %v594, 2
        %v1388 = vsel %vm1373, %v1385, %v1387
        %v1389 = vrot.slane %v1152, 2
        %v1390 = vsel %vm1373, %v1387, %v1389
        %v1399 = vunpack.c.l.b16 %v1362
        %v1400 = vunpack.c.l.b16 %v1363
        %v1401 = vunpack.c.l.b16 %v1364
        %v1402 = vunpack.c.l.b16 %v1365
        %v1403 = vunpack.c.l.b16 %v1366
        %v1404 = vunpack.c.l.b16 %v1367
        %v1405 = vunpack.c.l.b16 %v1368
        %v1406 = vunpack.c.l.b16 %v1369
        %v1407 = vpack.c.b16 %v1400, %v1399
        %v1408 = vpack.c.b16 %v1402, %v1401
        %v1409 = vpack.c.b16 %v1404, %v1403
        %v1410 = vpack.c.b16 %v1406, %v1405
        %v1416 = vsel %vm689, %v1376, 0
        %v1419 = vsel %vm689, %v1378, 0
        %v1422 = vsel %vm689, %v1380, 0
        %v1425 = vsel %vm689, %v1382, 0
        %v1428 = vsel %vm689, %v1384, 0
        %v1431 = vsel %vm689, %v1386, 0
        %v1434 = vsel %vm689, %v1388, 0
        %v1437 = vsel %vm689, %v1390, 0
        %1439 = vmatprep.subr.bf16.mxu0 0
        %1440 = vmatpush1.bf16.msra.mxu0 0
        %1441 = vmatprep.subr.bf16.mxu0 0
        %1442 = vmatpush1.bf16.msra.mxu0 0
        %1443 = vmatprep.subr.bf16.mxu0 0
        %1444 = vmatpush1.bf16.msra.mxu0 0
        %1445 = vmatprep.subr.bf16.mxu0 0
        %1446 = vmatpush1.bf16.msra.mxu0 0
        %1447 = vmatprep.subr.bf16.mxu0 0
        %1448 = vmatpush1.bf16.msra.mxu0 %v1410
        %1449 = vmatprep.subr.bf16.mxu0 0
        %1450 = vmatpush1.bf16.msra.mxu0 %v1409
        %1451 = vmatprep.subr.bf16.mxu0 0
        %1452 = vmatpush1.bf16.msra.mxu0 %v1408
        %1453 = vmatprep.subr.bf16.mxu0 0
        %1454 = vmatpush1.bf16.msra.mxu0 %v1407
        %1455 = vmatprep.subr.bf16.mxu0 0
        %1456 = vmatpush2.bf16.msra.mxu0 0
        %1457 = vmatprep.subr.bf16.mxu0 0
        %1458 = vmatpush2.bf16.msra.mxu0 0
        %1459 = vmatprep.subr.bf16.mxu0 0
        %1460 = vmatpush2.bf16.msra.mxu0 0
        %1461 = vmatprep.subr.bf16.mxu0 0
        %1462 = vmatpush2.bf16.msra.mxu0 0
        %1463 = vmatprep.subr.bf16.mxu0 0
        %1464 = vmatpush2.bf16.msra.mxu0 0
        %1465 = vmatprep.subr.bf16.mxu0 0
        %1466 = vmatpush2.bf16.msra.mxu0 0
        %1467 = vmatprep.subr.bf16.mxu0 0
        %1468 = vmatpush2.bf16.msra.mxu0 0
        %1469 = vmatprep.subr.bf16.mxu0 0
        %1470 = vmatpush2.bf16.msra.mxu0 0
        %1471 = vmatprep.mubr.bf16.mxu0 0
        %1472 = vmatmul.mubr.bf16.gmra.mxu0 %v1416
        %v1473 = vpop.f32.mrf.mxu0
        %v1474 = vadd.f32 0.0, %v1473
        %v1475 = vpop.f32.mrf.mxu0
        %v1476 = vpop.f32.mrf.mxu0
        %v1477 = vadd.f32 0.0, %v1476
        %v1478 = vpop.f32.mrf.mxu0
        %1479 = vmatprep.mubr.bf16.mxu0 0
        %1480 = vmatmul.mubr.bf16.gmra.mxu0 %v1419
        %v1481 = vpop.f32.mrf.mxu0
        %v1482 = vadd.f32 0.0, %v1481
        %v1483 = vpop.f32.mrf.mxu0
        %v1484 = vpop.f32.mrf.mxu0
        %v1485 = vadd.f32 0.0, %v1484
        %v1486 = vpop.f32.mrf.mxu0
        %1487 = vmatprep.mubr.bf16.mxu0 0
        %1488 = vmatmul.mubr.bf16.gmra.mxu0 %v1422
        %v1489 = vpop.f32.mrf.mxu0
        %v1490 = vadd.f32 0.0, %v1489
        %v1491 = vpop.f32.mrf.mxu0
        %v1492 = vpop.f32.mrf.mxu0
        %v1493 = vadd.f32 0.0, %v1492
        %v1494 = vpop.f32.mrf.mxu0
        %1495 = vmatprep.mubr.bf16.mxu0 0
        %1496 = vmatmul.mubr.bf16.gmra.mxu0 %v1425
        %v1497 = vpop.f32.mrf.mxu0
        %v1498 = vadd.f32 0.0, %v1497
        %v1499 = vpop.f32.mrf.mxu0
        %v1500 = vpop.f32.mrf.mxu0
        %v1501 = vadd.f32 0.0, %v1500
        %v1502 = vpop.f32.mrf.mxu0
        %1503 = vmatprep.mubr.bf16.mxu0 0
        %1504 = vmatmul.mubr.bf16.gmra.mxu0 %v1428
        %v1505 = vpop.f32.mrf.mxu0
        %v1506 = vadd.f32 0.0, %v1505
        %v1507 = vpop.f32.mrf.mxu0
        %v1508 = vpop.f32.mrf.mxu0
        %v1509 = vadd.f32 0.0, %v1508
        %v1510 = vpop.f32.mrf.mxu0
        %1511 = vmatprep.mubr.bf16.mxu0 0
        %1512 = vmatmul.mubr.bf16.gmra.mxu0 %v1431
        %v1513 = vpop.f32.mrf.mxu0
        %v1514 = vadd.f32 0.0, %v1513
        %v1515 = vpop.f32.mrf.mxu0
        %v1516 = vpop.f32.mrf.mxu0
        %v1517 = vadd.f32 0.0, %v1516
        %v1518 = vpop.f32.mrf.mxu0
        %1519 = vmatprep.mubr.bf16.mxu0 0
        %1520 = vmatmul.mubr.bf16.gmra.mxu0 %v1434
        %v1521 = vpop.f32.mrf.mxu0
        %v1522 = vadd.f32 0.0, %v1521
        %v1523 = vpop.f32.mrf.mxu0
        %v1524 = vpop.f32.mrf.mxu0
        %v1525 = vadd.f32 0.0, %v1524
        %v1526 = vpop.f32.mrf.mxu0
        %1527 = vmatprep.mubr.bf16.mxu0 0
        %1528 = vmatmul.mubr.bf16.gmra.mxu0 %v1437
        %v1529 = vpop.f32.mrf.mxu0
        %v1530 = vadd.f32 0.0, %v1529
        %v1531 = vpop.f32.mrf.mxu0
        %v1532 = vpop.f32.mrf.mxu0
        %v1533 = vadd.f32 0.0, %v1532
        %v1534 = vpop.f32.mrf.mxu0
        %1535 = vdwg.mxu0
        %v1536 = vadd.f32 %v1344, %v1474
        %v1537 = vadd.f32 %v1345, %v1477
        %v1538 = vadd.f32 %v1346, %v1482
        %v1539 = vadd.f32 %v1347, %v1485
        %v1540 = vadd.f32 %v1348, %v1490
        %v1541 = vadd.f32 %v1349, %v1493
        %v1542 = vadd.f32 %v1350, %v1498
        %v1543 = vadd.f32 %v1351, %v1501
        %v1544 = vadd.f32 %v1352, %v1506
        %v1545 = vadd.f32 %v1353, %v1509
        %v1546 = vadd.f32 %v1354, %v1514
        %v1547 = vadd.f32 %v1355, %v1517
        %v1548 = vadd.f32 %v1356, %v1522
        %v1549 = vadd.f32 %v1357, %v1525
        %v1550 = vadd.f32 %v1358, %v1530
        %v1551 = vadd.f32 %v1359, %v1533
        %v1552 = vld [vmem:[%s4] sm:$0x1]
        %v1554 = vlaneseq
        %v1555 = vshrl.u32 %v1554, 7
        %v1556 = vsub.s32 0, %v1555
        %v1557 = vrot.slane %v1552, %v1556
        %v1559 = vadd.f32 %v1536, %v1557
        %v1560 = vadd.f32 %v1537, %v1557
        %v1561 = vadd.f32 %v1538, %v1557
        %v1562 = vadd.f32 %v1539, %v1557
        %v1563 = vadd.f32 %v1540, %v1557
        %v1564 = vadd.f32 %v1541, %v1557
        %v1565 = vadd.f32 %v1542, %v1557
        %v1566 = vadd.f32 %v1543, %v1557
        %v1567 = vadd.f32 %v1544, %v1557
        %v1568 = vadd.f32 %v1545, %v1557
        %v1569 = vadd.f32 %v1546, %v1557
        %v1570 = vadd.f32 %v1547, %v1557
        %v1571 = vadd.f32 %v1548, %v1557
        %v1572 = vadd.f32 %v1549, %v1557
        %v1573 = vadd.f32 %v1550, %v1557
        %v1574 = vadd.f32 %v1551, %v1557
        %v1575 = vmax.f32 %v1559, 0.0
        %v1576 = vmax.f32 %v1560, 0.0
        %v1577 = vmax.f32 %v1561, 0.0
        %v1578 = vmax.f32 %v1562, 0.0
        %v1579 = vmax.f32 %v1563, 0.0
        %v1580 = vmax.f32 %v1564, 0.0
        %v1581 = vmax.f32 %v1565, 0.0
        %v1582 = vmax.f32 %v1566, 0.0
        %v1583 = vmax.f32 %v1567, 0.0
        %v1584 = vmax.f32 %v1568, 0.0
        %v1585 = vmax.f32 %v1569, 0.0
        %v1586 = vmax.f32 %v1570, 0.0
        %v1587 = vmax.f32 %v1571, 0.0
        %v1588 = vmax.f32 %v1572, 0.0
        %v1589 = vmax.f32 %v1573, 0.0
        %v1590 = vmax.f32 %v1574, 0.0
        %v1591 = vpack.c.bf16 %v1576, %v1575
        %v1592 = vpack.c.bf16 %v1578, %v1577
        %v1593 = vpack.c.bf16 %v1580, %v1579
        %v1594 = vpack.c.bf16 %v1582, %v1581
        %v1595 = vpack.c.bf16 %v1584, %v1583
        %v1596 = vpack.c.bf16 %v1586, %v1585
        %v1597 = vpack.c.bf16 %v1588, %v1587
        %v1598 = vpack.c.bf16 %v1590, %v1589
        %v1607 = vunpack.c.l.b16 %v1591
        %v1608 = vunpack.c.h.b16 %v1591
        %v1609 = vunpack.c.l.b16 %v1592
        %v1610 = vunpack.c.h.b16 %v1592
        %v1611 = vunpack.c.l.b16 %v1593
        %v1612 = vunpack.c.h.b16 %v1593
        %v1613 = vunpack.c.l.b16 %v1594
        %v1614 = vunpack.c.h.b16 %v1594
        %v1615 = vunpack.c.l.b16 %v1595
        %v1616 = vunpack.c.h.b16 %v1595
        %v1617 = vunpack.c.l.b16 %v1596
        %v1618 = vunpack.c.h.b16 %v1596
        %v1619 = vunpack.c.l.b16 %v1597
        %v1620 = vunpack.c.h.b16 %v1597
        %v1621 = vunpack.c.l.b16 %v1598
        %v1622 = vunpack.c.h.b16 %v1598
        %v1623 = vpack.c.b16 %v1607, %v1607
        %v1624 = vpack.c.b16 %v1608, %v1608
        %v1625 = vpack.c.b16 %v1609, %v1609
        %v1626 = vpack.c.b16 %v1610, %v1610
        %v1627 = vpack.c.b16 %v1611, %v1611
        %v1628 = vpack.c.b16 %v1612, %v1612
        %v1629 = vpack.c.b16 %v1613, %v1613
        %v1630 = vpack.c.b16 %v1614, %v1614
        %v1631 = vpack.c.b16 %v1615, %v1615
        %v1632 = vpack.c.b16 %v1616, %v1616
        %v1633 = vpack.c.b16 %v1617, %v1617
        %v1634 = vpack.c.b16 %v1618, %v1618
        %v1635 = vpack.c.b16 %v1619, %v1619
        %v1636 = vpack.c.b16 %v1620, %v1620
        %v1637 = vpack.c.b16 %v1621, %v1621
        %v1638 = vpack.c.b16 %v1622, %v1622
        %v1639 = vrot.slane %v1623, 7
        %v1640 = vrot.slane %v1639, 4
        %v1641 = vrot.slane %v1624, 7
        %v1642 = vsel %vm434, %v1640, %v1641
        %v1643 = vrot.slane %v1641, 4
        %v1644 = vrot.slane %v1625, 7
        %v1645 = vsel %vm434, %v1643, %v1644
        %v1646 = vrot.slane %v1644, 4
        %v1647 = vrot.slane %v1626, 7
        %v1648 = vsel %vm434, %v1646, %v1647
        %v1649 = vrot.slane %v1647, 4
        %v1650 = vrot.slane %v1627, 7
        %v1651 = vsel %vm434, %v1649, %v1650
        %v1652 = vrot.slane %v1650, 4
        %v1653 = vrot.slane %v1628, 7
        %v1654 = vsel %vm434, %v1652, %v1653
        %v1655 = vrot.slane %v1653, 4
        %v1656 = vrot.slane %v1629, 7
        %v1657 = vsel %vm434, %v1655, %v1656
        %v1658 = vrot.slane %v1656, 4
        %v1659 = vrot.slane %v1630, 7
        %v1660 = vsel %vm434, %v1658, %v1659
        %v1661 = vrot.slane %v1659, 4
        %v1662 = vrot.slane %v1631, 7
        %v1663 = vsel %vm434, %v1661, %v1662
        %v1664 = vrot.slane %v1662, 4
        %v1665 = vrot.slane %v1632, 7
        %v1666 = vsel %vm434, %v1664, %v1665
        %v1667 = vrot.slane %v1665, 4
        %v1668 = vrot.slane %v1633, 7
        %v1669 = vsel %vm434, %v1667, %v1668
        %v1670 = vrot.slane %v1668, 4
        %v1671 = vrot.slane %v1634, 7
        %v1672 = vsel %vm434, %v1670, %v1671
        %v1673 = vrot.slane %v1671, 4
        %v1674 = vrot.slane %v1635, 7
        %v1675 = vsel %vm434, %v1673, %v1674
        %v1676 = vrot.slane %v1674, 4
        %v1677 = vrot.slane %v1636, 7
        %v1678 = vsel %vm434, %v1676, %v1677
        %v1679 = vrot.slane %v1677, 4
        %v1680 = vrot.slane %v1637, 7
        %v1681 = vsel %vm434, %v1679, %v1680
        %v1682 = vrot.slane %v1680, 4
        %v1683 = vrot.slane %v1638, 7
        %v1684 = vsel %vm434, %v1682, %v1683
        %v1685 = vrot.slane %v1683, 4
        %1703 = vst [vmem:[#allocation3] sm:$0xe] %v1639
        %1704 = vst [vmem:[#allocation3 + $0x4] sm:$0xf] %v1642
        %1705 = vst [vmem:[#allocation3 + $0x8] sm:$0xf] %v1645
        %1706 = vst [vmem:[#allocation3 + $0xc] sm:$0xf] %v1648
        %1707 = vst [vmem:[#allocation3 + $0x10] sm:$0xf] %v1651
        %1708 = vst [vmem:[#allocation3 + $0x14] sm:$0xf] %v1654
        %1709 = vst [vmem:[#allocation3 + $0x18] sm:$0xf] %v1657
        %1710 = vst [vmem:[#allocation3 + $0x1c] sm:$0xf] %v1660
        %1711 = vst [vmem:[#allocation3 + $0x20] sm:$0xf] %v1663
        %1712 = vst [vmem:[#allocation3 + $0x24] sm:$0xf] %v1666
        %1713 = vst [vmem:[#allocation3 + $0x28] sm:$0xf] %v1669
        %1714 = vst [vmem:[#allocation3 + $0x2c] sm:$0xf] %v1672
        %1715 = vst [vmem:[#allocation3 + $0x30] sm:$0xf] %v1675
        %1716 = vst [vmem:[#allocation3 + $0x34] sm:$0xf] %v1678
        %1717 = vst [vmem:[#allocation3 + $0x38] sm:$0xf] %v1681
        %1718 = vst [vmem:[#allocation3 + $0x3c] sm:$0xf] %v1684
        %1719 = vst [vmem:[#allocation3 + $0x40] sm:$0x1] %v1685
        %v1720 = vld [vmem:[#allocation3] sm:$0xf]
        %v1721 = vld [vmem:[#allocation3 + $0x4] sm:$0xf]
        %v1722 = vld [vmem:[#allocation3 + $0x8] sm:$0xf]
        %v1723 = vld [vmem:[#allocation3 + $0xc] sm:$0xf]
        %v1724 = vld [vmem:[#allocation3 + $0x10] sm:$0xf]
        %v1725 = vld [vmem:[#allocation3 + $0x14] sm:$0xf]
        %v1726 = vld [vmem:[#allocation3 + $0x18] sm:$0xf]
        %v1727 = vld [vmem:[#allocation3 + $0x1c] sm:$0xf]
        %v1728 = vld [vmem:[#allocation3 + $0x20] sm:$0xf]
        %v1729 = vld [vmem:[#allocation3 + $0x24] sm:$0xf]
        %v1730 = vld [vmem:[#allocation3 + $0x28] sm:$0xf]
        %v1731 = vld [vmem:[#allocation3 + $0x2c] sm:$0xf]
        %v1732 = vld [vmem:[#allocation3 + $0x30] sm:$0xf]
        %v1733 = vld [vmem:[#allocation3 + $0x34] sm:$0xf]
        %v1734 = vld [vmem:[#allocation3 + $0x38] sm:$0xf]
        %v1735 = vld [vmem:[#allocation3 + $0x3c] sm:$0xf]
        %v1736 = vld [vmem:[%s5] sm:$0xf]
        %v1737 = vld [vmem:[%s5 + $0x4] sm:$0xf]
        %v1738 = vld [vmem:[%s5 + $0x8] sm:$0xf]
        %v1739 = vld [vmem:[%s5 + $0xc] sm:$0xf]
        %v1740 = vld [vmem:[%s5 + $0x10] sm:$0xf]
        %v1741 = vld [vmem:[%s5 + $0x14] sm:$0xf]
        %v1742 = vld [vmem:[%s5 + $0x18] sm:$0xf]
        %v1743 = vld [vmem:[%s5 + $0x1c] sm:$0xf]
        %v1744 = vld [vmem:[%s5 + $0x20] sm:$0xf]
        %v1745 = vld [vmem:[%s5 + $0x24] sm:$0xf]
        %v1746 = vld [vmem:[%s5 + $0x28] sm:$0xf]
        %v1747 = vld [vmem:[%s5 + $0x2c] sm:$0xf]
        %v1748 = vld [vmem:[%s5 + $0x30] sm:$0xf]
        %v1749 = vld [vmem:[%s5 + $0x34] sm:$0xf]
        %v1750 = vld [vmem:[%s5 + $0x38] sm:$0xf]
        %v1751 = vld [vmem:[%s5 + $0x3c] sm:$0xf]
        %v1752 = vld [vmem:[#allocation3 + $0x40] sm:$0x1]
        %s1753 = scalar_lea.vmem %s5, 64
        %v1754 = vld [vmem:[%s1753] sm:$0xf]
        %v1755 = vld [vmem:[%s1753 + $0x4] sm:$0xf]
        %v1756 = vld [vmem:[%s1753 + $0x8] sm:$0xf]
        %v1757 = vld [vmem:[%s1753 + $0xc] sm:$0xf]
        %v1758 = vld [vmem:[%s1753 + $0x10] sm:$0xf]
        %v1759 = vld [vmem:[%s1753 + $0x14] sm:$0xf]
        %v1760 = vld [vmem:[%s1753 + $0x18] sm:$0xf]
        %v1761 = vld [vmem:[%s1753 + $0x1c] sm:$0xf]
        %v1762 = vld [vmem:[%s1753 + $0x20] sm:$0xf]
        %v1763 = vld [vmem:[%s1753 + $0x24] sm:$0xf]
        %v1764 = vld [vmem:[%s1753 + $0x28] sm:$0xf]
        %v1765 = vld [vmem:[%s1753 + $0x2c] sm:$0xf]
        %v1766 = vld [vmem:[%s1753 + $0x30] sm:$0xf]
        %v1767 = vld [vmem:[%s1753 + $0x34] sm:$0xf]
        %v1768 = vld [vmem:[%s1753 + $0x38] sm:$0xf]
        %v1769 = vld [vmem:[%s1753 + $0x3c] sm:$0xf]
        %v1787 = vunpack.c.l.b16 %v1720
        %v1788 = vunpack.c.l.b16 %v1721
        %v1789 = vunpack.c.l.b16 %v1722
        %v1790 = vunpack.c.l.b16 %v1723
        %v1791 = vunpack.c.l.b16 %v1724
        %v1792 = vunpack.c.l.b16 %v1725
        %v1793 = vunpack.c.l.b16 %v1726
        %v1794 = vunpack.c.l.b16 %v1727
        %v1795 = vunpack.c.l.b16 %v1728
        %v1796 = vunpack.c.l.b16 %v1729
        %v1797 = vunpack.c.l.b16 %v1730
        %v1798 = vunpack.c.l.b16 %v1731
        %v1799 = vunpack.c.l.b16 %v1732
        %v1800 = vunpack.c.l.b16 %v1733
        %v1801 = vunpack.c.l.b16 %v1734
        %v1802 = vunpack.c.l.b16 %v1735
        %v1803 = vunpack.c.l.b16 %v1752
        %v1804 = vpack.c.b16 %v1788, %v1787
        %v1805 = vpack.c.b16 %v1790, %v1789
        %v1806 = vpack.c.b16 %v1792, %v1791
        %v1807 = vpack.c.b16 %v1794, %v1793
        %v1808 = vpack.c.b16 %v1796, %v1795
        %v1809 = vpack.c.b16 %v1798, %v1797
        %v1810 = vpack.c.b16 %v1800, %v1799
        %v1811 = vpack.c.b16 %v1802, %v1801
        %v1812 = vpack.c.b16 %v1803, %v1803
        %v1814 = vshrl.u32 %v1804, 16
        %v1816 = vshll.u32 %v1804, 16
        %v1818 = vrot.slane %v1816, 1
        %v1819 = vor.u32 %v1814, %v1818
        %v1821 = vshll.u32 %v1805, 16
        %v1823 = vrot.slane %v1821, 1
        %v1824 = vsel %vm596, %v1819, %v1823
        %v1825 = vshrl.u32 %v1805, 16
        %v1827 = vor.u32 %v1825, %v1823
        %v1829 = vshll.u32 %v1806, 16
        %v1831 = vrot.slane %v1829, 1
        %v1832 = vsel %vm596, %v1827, %v1831
        %v1833 = vshrl.u32 %v1806, 16
        %v1835 = vor.u32 %v1833, %v1831
        %v1837 = vshll.u32 %v1807, 16
        %v1839 = vrot.slane %v1837, 1
        %v1840 = vsel %vm596, %v1835, %v1839
        %v1841 = vshrl.u32 %v1807, 16
        %v1843 = vor.u32 %v1841, %v1839
        %v1845 = vshll.u32 %v1808, 16
        %v1847 = vrot.slane %v1845, 1
        %v1848 = vsel %vm596, %v1843, %v1847
        %v1849 = vshrl.u32 %v1808, 16
        %v1851 = vor.u32 %v1849, %v1847
        %v1853 = vshll.u32 %v1809, 16
        %v1855 = vrot.slane %v1853, 1
        %v1856 = vsel %vm596, %v1851, %v1855
        %v1857 = vshrl.u32 %v1809, 16
        %v1859 = vor.u32 %v1857, %v1855
        %v1861 = vshll.u32 %v1810, 16
        %v1863 = vrot.slane %v1861, 1
        %v1864 = vsel %vm596, %v1859, %v1863
        %v1865 = vshrl.u32 %v1810, 16
        %v1867 = vor.u32 %v1865, %v1863
        %v1869 = vshll.u32 %v1811, 16
        %v1871 = vrot.slane %v1869, 1
        %v1872 = vsel %vm596, %v1867, %v1871
        %v1873 = vshrl.u32 %v1811, 16
        %v1875 = vor.u32 %v1873, %v1871
        %v1877 = vshll.u32 %v1812, 16
        %v1879 = vrot.slane %v1877, 1
        %v1880 = vsel %vm596, %v1875, %v1879
        %v1905 = vunpack.c.l.b16 %v1754
        %v1906 = vunpack.c.l.b16 %v1755
        %v1907 = vunpack.c.l.b16 %v1756
        %v1908 = vunpack.c.l.b16 %v1757
        %v1909 = vunpack.c.l.b16 %v1758
        %v1910 = vunpack.c.l.b16 %v1759
        %v1911 = vunpack.c.l.b16 %v1760
        %v1912 = vunpack.c.l.b16 %v1761
        %v1913 = vunpack.c.l.b16 %v1762
        %v1914 = vunpack.c.l.b16 %v1763
        %v1915 = vunpack.c.l.b16 %v1764
        %v1916 = vunpack.c.l.b16 %v1765
        %v1917 = vunpack.c.l.b16 %v1766
        %v1918 = vunpack.c.l.b16 %v1767
        %v1919 = vunpack.c.l.b16 %v1768
        %v1920 = vunpack.c.l.b16 %v1769
        %v1921 = vpack.c.b16 %v1906, %v1905
        %v1922 = vpack.c.b16 %v1908, %v1907
        %v1923 = vpack.c.b16 %v1910, %v1909
        %v1924 = vpack.c.b16 %v1912, %v1911
        %v1925 = vpack.c.b16 %v1914, %v1913
        %v1926 = vpack.c.b16 %v1916, %v1915
        %v1927 = vpack.c.b16 %v1918, %v1917
        %v1928 = vpack.c.b16 %v1920, %v1919
        %1937 = vmatprep.subr.bf16.mxu0 0
        %1938 = vmatpush1.bf16.msra.mxu0 %v1928
        %1939 = vmatprep.subr.bf16.mxu0 0
        %1940 = vmatpush1.bf16.msra.mxu0 %v1927
        %1941 = vmatprep.subr.bf16.mxu0 0
        %1942 = vmatpush1.bf16.msra.mxu0 %v1926
        %1943 = vmatprep.subr.bf16.mxu0 0
        %1944 = vmatpush1.bf16.msra.mxu0 %v1925
        %1945 = vmatprep.subr.bf16.mxu0 0
        %1946 = vmatpush1.bf16.msra.mxu0 %v1924
        %1947 = vmatprep.subr.bf16.mxu0 0
        %1948 = vmatpush1.bf16.msra.mxu0 %v1923
        %1949 = vmatprep.subr.bf16.mxu0 0
        %1950 = vmatpush1.bf16.msra.mxu0 %v1922
        %1951 = vmatprep.subr.bf16.mxu0 0
        %1952 = vmatpush1.bf16.msra.mxu0 %v1921
        %1953 = vmatprep.subr.bf16.mxu0 0
        %1954 = vmatpush2.bf16.msra.mxu0 0
        %1955 = vmatprep.subr.bf16.mxu0 0
        %1956 = vmatpush2.bf16.msra.mxu0 0
        %1957 = vmatprep.subr.bf16.mxu0 0
        %1958 = vmatpush2.bf16.msra.mxu0 0
        %1959 = vmatprep.subr.bf16.mxu0 0
        %1960 = vmatpush2.bf16.msra.mxu0 0
        %1961 = vmatprep.subr.bf16.mxu0 0
        %1962 = vmatpush2.bf16.msra.mxu0 0
        %1963 = vmatprep.subr.bf16.mxu0 0
        %1964 = vmatpush2.bf16.msra.mxu0 0
        %1965 = vmatprep.subr.bf16.mxu0 0
        %1966 = vmatpush2.bf16.msra.mxu0 0
        %1967 = vmatprep.subr.bf16.mxu0 0
        %1968 = vmatpush2.bf16.msra.mxu0 0
        %1969 = vmatprep.mubr.bf16.mxu0 0
        %1970 = vmatmul.mubr.bf16.gmra.mxu0 %v1824
        %v1971 = vpop.f32.mrf.mxu0
        %v1972 = vadd.f32 0.0, %v1971
        %v1973 = vpop.f32.mrf.mxu0
        %v1974 = vpop.f32.mrf.mxu0
        %v1975 = vadd.f32 0.0, %v1974
        %v1976 = vpop.f32.mrf.mxu0
        %1977 = vmatprep.mubr.bf16.mxu0 0
        %1978 = vmatmul.mubr.bf16.gmra.mxu0 %v1832
        %v1979 = vpop.f32.mrf.mxu0
        %v1980 = vadd.f32 0.0, %v1979
        %v1981 = vpop.f32.mrf.mxu0
        %v1982 = vpop.f32.mrf.mxu0
        %v1983 = vadd.f32 0.0, %v1982
        %v1984 = vpop.f32.mrf.mxu0
        %1985 = vmatprep.mubr.bf16.mxu0 0
        %1986 = vmatmul.mubr.bf16.gmra.mxu0 %v1840
        %v1987 = vpop.f32.mrf.mxu0
        %v1988 = vadd.f32 0.0, %v1987
        %v1989 = vpop.f32.mrf.mxu0
        %v1990 = vpop.f32.mrf.mxu0
        %v1991 = vadd.f32 0.0, %v1990
        %v1992 = vpop.f32.mrf.mxu0
        %1993 = vmatprep.mubr.bf16.mxu0 0
        %1994 = vmatmul.mubr.bf16.gmra.mxu0 %v1848
        %v1995 = vpop.f32.mrf.mxu0
        %v1996 = vadd.f32 0.0, %v1995
        %v1997 = vpop.f32.mrf.mxu0
        %v1998 = vpop.f32.mrf.mxu0
        %v1999 = vadd.f32 0.0, %v1998
        %v2000 = vpop.f32.mrf.mxu0
        %2001 = vmatprep.mubr.bf16.mxu0 0
        %2002 = vmatmul.mubr.bf16.gmra.mxu0 %v1856
        %v2003 = vpop.f32.mrf.mxu0
        %v2004 = vadd.f32 0.0, %v2003
        %v2005 = vpop.f32.mrf.mxu0
        %v2006 = vpop.f32.mrf.mxu0
        %v2007 = vadd.f32 0.0, %v2006
        %v2008 = vpop.f32.mrf.mxu0
        %2009 = vmatprep.mubr.bf16.mxu0 0
        %2010 = vmatmul.mubr.bf16.gmra.mxu0 %v1864
        %v2011 = vpop.f32.mrf.mxu0
        %v2012 = vadd.f32 0.0, %v2011
        %v2013 = vpop.f32.mrf.mxu0
        %v2014 = vpop.f32.mrf.mxu0
        %v2015 = vadd.f32 0.0, %v2014
        %v2016 = vpop.f32.mrf.mxu0
        %2017 = vmatprep.mubr.bf16.mxu0 0
        %2018 = vmatmul.mubr.bf16.gmra.mxu0 %v1872
        %v2019 = vpop.f32.mrf.mxu0
        %v2020 = vadd.f32 0.0, %v2019
        %v2021 = vpop.f32.mrf.mxu0
        %v2022 = vpop.f32.mrf.mxu0
        %v2023 = vadd.f32 0.0, %v2022
        %v2024 = vpop.f32.mrf.mxu0
        %2025 = vmatprep.mubr.bf16.mxu0 0
        %2026 = vmatmul.mubr.bf16.gmra.mxu0 %v1880
        %v2027 = vpop.f32.mrf.mxu0
        %v2028 = vadd.f32 0.0, %v2027
        %v2029 = vpop.f32.mrf.mxu0
        %v2030 = vpop.f32.mrf.mxu0
        %v2031 = vadd.f32 0.0, %v2030
        %v2032 = vpop.f32.mrf.mxu0
        %2033 = vdwg.mxu0
        %v2058 = vunpack.c.l.b16 %v1736
        %v2059 = vunpack.c.l.b16 %v1737
        %v2060 = vunpack.c.l.b16 %v1738
        %v2061 = vunpack.c.l.b16 %v1739
        %v2062 = vunpack.c.l.b16 %v1740
        %v2063 = vunpack.c.l.b16 %v1741
        %v2064 = vunpack.c.l.b16 %v1742
        %v2065 = vunpack.c.l.b16 %v1743
        %v2066 = vunpack.c.l.b16 %v1744
        %v2067 = vunpack.c.l.b16 %v1745
        %v2068 = vunpack.c.l.b16 %v1746
        %v2069 = vunpack.c.l.b16 %v1747
        %v2070 = vunpack.c.l.b16 %v1748
        %v2071 = vunpack.c.l.b16 %v1749
        %v2072 = vunpack.c.l.b16 %v1750
        %v2073 = vunpack.c.l.b16 %v1751
        %v2074 = vpack.c.b16 %v2059, %v2058
        %v2075 = vpack.c.b16 %v2061, %v2060
        %v2076 = vpack.c.b16 %v2063, %v2062
        %v2077 = vpack.c.b16 %v2065, %v2064
        %v2078 = vpack.c.b16 %v2067, %v2066
        %v2079 = vpack.c.b16 %v2069, %v2068
        %v2080 = vpack.c.b16 %v2071, %v2070
        %v2081 = vpack.c.b16 %v2073, %v2072
        %2090 = vmatprep.subr.bf16.mxu0 0
        %2091 = vmatpush1.bf16.msra.mxu0 %v2081
        %2092 = vmatprep.subr.bf16.mxu0 0
        %2093 = vmatpush1.bf16.msra.mxu0 %v2080
        %2094 = vmatprep.subr.bf16.mxu0 0
        %2095 = vmatpush1.bf16.msra.mxu0 %v2079
        %2096 = vmatprep.subr.bf16.mxu0 0
        %2097 = vmatpush1.bf16.msra.mxu0 %v2078
        %2098 = vmatprep.subr.bf16.mxu0 0
        %2099 = vmatpush1.bf16.msra.mxu0 %v2077
        %2100 = vmatprep.subr.bf16.mxu0 0
        %2101 = vmatpush1.bf16.msra.mxu0 %v2076
        %2102 = vmatprep.subr.bf16.mxu0 0
        %2103 = vmatpush1.bf16.msra.mxu0 %v2075
        %2104 = vmatprep.subr.bf16.mxu0 0
        %2105 = vmatpush1.bf16.msra.mxu0 %v2074
        %2106 = vmatprep.subr.bf16.mxu0 0
        %2107 = vmatpush2.bf16.msra.mxu0 0
        %2108 = vmatprep.subr.bf16.mxu0 0
        %2109 = vmatpush2.bf16.msra.mxu0 0
        %2110 = vmatprep.subr.bf16.mxu0 0
        %2111 = vmatpush2.bf16.msra.mxu0 0
        %2112 = vmatprep.subr.bf16.mxu0 0
        %2113 = vmatpush2.bf16.msra.mxu0 0
        %2114 = vmatprep.subr.bf16.mxu0 0
        %2115 = vmatpush2.bf16.msra.mxu0 0
        %2116 = vmatprep.subr.bf16.mxu0 0
        %2117 = vmatpush2.bf16.msra.mxu0 0
        %2118 = vmatprep.subr.bf16.mxu0 0
        %2119 = vmatpush2.bf16.msra.mxu0 0
        %2120 = vmatprep.subr.bf16.mxu0 0
        %2121 = vmatpush2.bf16.msra.mxu0 0
        %2122 = vmatprep.mubr.bf16.mxu0 0
        %2123 = vmatmul.mubr.bf16.gmra.mxu0 %v1804
        %v2124 = vpop.f32.mrf.mxu0
        %v2125 = vadd.f32 %v1972, %v2124
        %v2126 = vpop.f32.mrf.mxu0
        %v2127 = vpop.f32.mrf.mxu0
        %v2128 = vadd.f32 %v1975, %v2127
        %v2129 = vpop.f32.mrf.mxu0
        %2130 = vmatprep.mubr.bf16.mxu0 0
        %2131 = vmatmul.mubr.bf16.gmra.mxu0 %v1805
        %v2132 = vpop.f32.mrf.mxu0
        %v2133 = vadd.f32 %v1980, %v2132
        %v2134 = vpop.f32.mrf.mxu0
        %v2135 = vpop.f32.mrf.mxu0
        %v2136 = vadd.f32 %v1983, %v2135
        %v2137 = vpop.f32.mrf.mxu0
        %2138 = vmatprep.mubr.bf16.mxu0 0
        %2139 = vmatmul.mubr.bf16.gmra.mxu0 %v1806
        %v2140 = vpop.f32.mrf.mxu0
        %v2141 = vadd.f32 %v1988, %v2140
        %v2142 = vpop.f32.mrf.mxu0
        %v2143 = vpop.f32.mrf.mxu0
        %v2144 = vadd.f32 %v1991, %v2143
        %v2145 = vpop.f32.mrf.mxu0
        %2146 = vmatprep.mubr.bf16.mxu0 0
        %2147 = vmatmul.mubr.bf16.gmra.mxu0 %v1807
        %v2148 = vpop.f32.mrf.mxu0
        %v2149 = vadd.f32 %v1996, %v2148
        %v2150 = vpop.f32.mrf.mxu0
        %v2151 = vpop.f32.mrf.mxu0
        %v2152 = vadd.f32 %v1999, %v2151
        %v2153 = vpop.f32.mrf.mxu0
        %2154 = vmatprep.mubr.bf16.mxu0 0
        %2155 = vmatmul.mubr.bf16.gmra.mxu0 %v1808
        %v2156 = vpop.f32.mrf.mxu0
        %v2157 = vadd.f32 %v2004, %v2156
        %v2158 = vpop.f32.mrf.mxu0
        %v2159 = vpop.f32.mrf.mxu0
        %v2160 = vadd.f32 %v2007, %v2159
        %v2161 = vpop.f32.mrf.mxu0
        %2162 = vmatprep.mubr.bf16.mxu0 0
        %2163 = vmatmul.mubr.bf16.gmra.mxu0 %v1809
        %v2164 = vpop.f32.mrf.mxu0
        %v2165 = vadd.f32 %v2012, %v2164
        %v2166 = vpop.f32.mrf.mxu0
        %v2167 = vpop.f32.mrf.mxu0
        %v2168 = vadd.f32 %v2015, %v2167
        %v2169 = vpop.f32.mrf.mxu0
        %2170 = vmatprep.mubr.bf16.mxu0 0
        %2171 = vmatmul.mubr.bf16.gmra.mxu0 %v1810
        %v2172 = vpop.f32.mrf.mxu0
        %v2173 = vadd.f32 %v2020, %v2172
        %v2174 = vpop.f32.mrf.mxu0
        %v2175 = vpop.f32.mrf.mxu0
        %v2176 = vadd.f32 %v2023, %v2175
        %v2177 = vpop.f32.mrf.mxu0
        %2178 = vmatprep.mubr.bf16.mxu0 0
        %2179 = vmatmul.mubr.bf16.gmra.mxu0 %v1811
        %v2180 = vpop.f32.mrf.mxu0
        %v2181 = vadd.f32 %v2028, %v2180
        %v2182 = vpop.f32.mrf.mxu0
        %v2183 = vpop.f32.mrf.mxu0
        %v2184 = vadd.f32 %v2031, %v2183
        %v2185 = vpop.f32.mrf.mxu0
        %2186 = vdwg.mxu0
        %v2187 = vld [vmem:[#allocation3] sm:$0xe]
        %s2188 = scalar_lea.vmem %s5, 128
        %v2189 = vld [vmem:[%s2188] sm:$0xf]
        %v2190 = vld [vmem:[%s2188 + $0x4] sm:$0xf]
        %v2191 = vld [vmem:[%s2188 + $0x8] sm:$0xf]
        %v2192 = vld [vmem:[%s2188 + $0xc] sm:$0xf]
        %v2193 = vld [vmem:[%s2188 + $0x10] sm:$0xf]
        %v2194 = vld [vmem:[%s2188 + $0x14] sm:$0xf]
        %v2195 = vld [vmem:[%s2188 + $0x18] sm:$0xf]
        %v2196 = vld [vmem:[%s2188 + $0x1c] sm:$0xf]
        %v2197 = vld [vmem:[%s2188 + $0x20] sm:$0xf]
        %v2198 = vld [vmem:[%s2188 + $0x24] sm:$0xf]
        %v2199 = vld [vmem:[%s2188 + $0x28] sm:$0xf]
        %v2200 = vld [vmem:[%s2188 + $0x2c] sm:$0xf]
        %v2201 = vld [vmem:[%s2188 + $0x30] sm:$0xf]
        %v2202 = vld [vmem:[%s2188 + $0x34] sm:$0xf]
        %v2203 = vld [vmem:[%s2188 + $0x38] sm:$0xf]
        %v2204 = vld [vmem:[%s2188 + $0x3c] sm:$0xf]
        %v2206 = vunpack.c.l.b16 %v2187
        %v2207 = vpack.c.b16 %v1788, %v2206
        %v2208 = vrot.slane %v2207, 1
        %v2209 = vrot.slane %v1805, 1
        %v2210 = vsel %vm961, %v2208, %v2209
        %v2211 = vrot.slane %v1806, 1
        %v2212 = vsel %vm961, %v2209, %v2211
        %v2213 = vrot.slane %v1807, 1
        %v2214 = vsel %vm961, %v2211, %v2213
        %v2215 = vrot.slane %v1808, 1
        %v2216 = vsel %vm961, %v2213, %v2215
        %v2217 = vrot.slane %v1809, 1
        %v2218 = vsel %vm961, %v2215, %v2217
        %v2219 = vrot.slane %v1810, 1
        %v2220 = vsel %vm961, %v2217, %v2219
        %v2221 = vrot.slane %v1811, 1
        %v2222 = vsel %vm961, %v2219, %v2221
        %v2223 = vrot.slane %v1812, 1
        %v2224 = vsel %vm961, %v2221, %v2223
        %v2249 = vunpack.c.l.b16 %v2189
        %v2250 = vunpack.c.l.b16 %v2190
        %v2251 = vunpack.c.l.b16 %v2191
        %v2252 = vunpack.c.l.b16 %v2192
        %v2253 = vunpack.c.l.b16 %v2193
        %v2254 = vunpack.c.l.b16 %v2194
        %v2255 = vunpack.c.l.b16 %v2195
        %v2256 = vunpack.c.l.b16 %v2196
        %v2257 = vunpack.c.l.b16 %v2197
        %v2258 = vunpack.c.l.b16 %v2198
        %v2259 = vunpack.c.l.b16 %v2199
        %v2260 = vunpack.c.l.b16 %v2200
        %v2261 = vunpack.c.l.b16 %v2201
        %v2262 = vunpack.c.l.b16 %v2202
        %v2263 = vunpack.c.l.b16 %v2203
        %v2264 = vunpack.c.l.b16 %v2204
        %v2265 = vpack.c.b16 %v2250, %v2249
        %v2266 = vpack.c.b16 %v2252, %v2251
        %v2267 = vpack.c.b16 %v2254, %v2253
        %v2268 = vpack.c.b16 %v2256, %v2255
        %v2269 = vpack.c.b16 %v2258, %v2257
        %v2270 = vpack.c.b16 %v2260, %v2259
        %v2271 = vpack.c.b16 %v2262, %v2261
        %v2272 = vpack.c.b16 %v2264, %v2263
        %2281 = vmatprep.subr.bf16.mxu0 0
        %2282 = vmatpush1.bf16.msra.mxu0 %v2272
        %2283 = vmatprep.subr.bf16.mxu0 0
        %2284 = vmatpush1.bf16.msra.mxu0 %v2271
        %2285 = vmatprep.subr.bf16.mxu0 0
        %2286 = vmatpush1.bf16.msra.mxu0 %v2270
        %2287 = vmatprep.subr.bf16.mxu0 0
        %2288 = vmatpush1.bf16.msra.mxu0 %v2269
        %2289 = vmatprep.subr.bf16.mxu0 0
        %2290 = vmatpush1.bf16.msra.mxu0 %v2268
        %2291 = vmatprep.subr.bf16.mxu0 0
        %2292 = vmatpush1.bf16.msra.mxu0 %v2267
        %2293 = vmatprep.subr.bf16.mxu0 0
        %2294 = vmatpush1.bf16.msra.mxu0 %v2266
        %2295 = vmatprep.subr.bf16.mxu0 0
        %2296 = vmatpush1.bf16.msra.mxu0 %v2265
        %2297 = vmatprep.subr.bf16.mxu0 0
        %2298 = vmatpush2.bf16.msra.mxu0 0
        %2299 = vmatprep.subr.bf16.mxu0 0
        %2300 = vmatpush2.bf16.msra.mxu0 0
        %2301 = vmatprep.subr.bf16.mxu0 0
        %2302 = vmatpush2.bf16.msra.mxu0 0
        %2303 = vmatprep.subr.bf16.mxu0 0
        %2304 = vmatpush2.bf16.msra.mxu0 0
        %2305 = vmatprep.subr.bf16.mxu0 0
        %2306 = vmatpush2.bf16.msra.mxu0 0
        %2307 = vmatprep.subr.bf16.mxu0 0
        %2308 = vmatpush2.bf16.msra.mxu0 0
        %2309 = vmatprep.subr.bf16.mxu0 0
        %2310 = vmatpush2.bf16.msra.mxu0 0
        %2311 = vmatprep.subr.bf16.mxu0 0
        %2312 = vmatpush2.bf16.msra.mxu0 0
        %2313 = vmatprep.mubr.bf16.mxu0 0
        %2314 = vmatmul.mubr.bf16.gmra.mxu0 %v2210
        %v2315 = vpop.f32.mrf.mxu0
        %v2316 = vadd.f32 0.0, %v2315
        %v2317 = vpop.f32.mrf.mxu0
        %v2318 = vpop.f32.mrf.mxu0
        %v2319 = vadd.f32 0.0, %v2318
        %v2320 = vpop.f32.mrf.mxu0
        %2321 = vmatprep.mubr.bf16.mxu0 0
        %2322 = vmatmul.mubr.bf16.gmra.mxu0 %v2212
        %v2323 = vpop.f32.mrf.mxu0
        %v2324 = vadd.f32 0.0, %v2323
        %v2325 = vpop.f32.mrf.mxu0
        %v2326 = vpop.f32.mrf.mxu0
        %v2327 = vadd.f32 0.0, %v2326
        %v2328 = vpop.f32.mrf.mxu0
        %2329 = vmatprep.mubr.bf16.mxu0 0
        %2330 = vmatmul.mubr.bf16.gmra.mxu0 %v2214
        %v2331 = vpop.f32.mrf.mxu0
        %v2332 = vadd.f32 0.0, %v2331
        %v2333 = vpop.f32.mrf.mxu0
        %v2334 = vpop.f32.mrf.mxu0
        %v2335 = vadd.f32 0.0, %v2334
        %v2336 = vpop.f32.mrf.mxu0
        %2337 = vmatprep.mubr.bf16.mxu0 0
        %2338 = vmatmul.mubr.bf16.gmra.mxu0 %v2216
        %v2339 = vpop.f32.mrf.mxu0
        %v2340 = vadd.f32 0.0, %v2339
        %v2341 = vpop.f32.mrf.mxu0
        %v2342 = vpop.f32.mrf.mxu0
        %v2343 = vadd.f32 0.0, %v2342
        %v2344 = vpop.f32.mrf.mxu0
        %2345 = vmatprep.mubr.bf16.mxu0 0
        %2346 = vmatmul.mubr.bf16.gmra.mxu0 %v2218
        %v2347 = vpop.f32.mrf.mxu0
        %v2348 = vadd.f32 0.0, %v2347
        %v2349 = vpop.f32.mrf.mxu0
        %v2350 = vpop.f32.mrf.mxu0
        %v2351 = vadd.f32 0.0, %v2350
        %v2352 = vpop.f32.mrf.mxu0
        %2353 = vmatprep.mubr.bf16.mxu0 0
        %2354 = vmatmul.mubr.bf16.gmra.mxu0 %v2220
        %v2355 = vpop.f32.mrf.mxu0
        %v2356 = vadd.f32 0.0, %v2355
        %v2357 = vpop.f32.mrf.mxu0
        %v2358 = vpop.f32.mrf.mxu0
        %v2359 = vadd.f32 0.0, %v2358
        %v2360 = vpop.f32.mrf.mxu0
        %2361 = vmatprep.mubr.bf16.mxu0 0
        %2362 = vmatmul.mubr.bf16.gmra.mxu0 %v2222
        %v2363 = vpop.f32.mrf.mxu0
        %v2364 = vadd.f32 0.0, %v2363
        %v2365 = vpop.f32.mrf.mxu0
        %v2366 = vpop.f32.mrf.mxu0
        %v2367 = vadd.f32 0.0, %v2366
        %v2368 = vpop.f32.mrf.mxu0
        %2369 = vmatprep.mubr.bf16.mxu0 0
        %2370 = vmatmul.mubr.bf16.gmra.mxu0 %v2224
        %v2371 = vpop.f32.mrf.mxu0
        %v2372 = vadd.f32 0.0, %v2371
        %v2373 = vpop.f32.mrf.mxu0
        %v2374 = vpop.f32.mrf.mxu0
        %v2375 = vadd.f32 0.0, %v2374
        %v2376 = vpop.f32.mrf.mxu0
        %2377 = vdwg.mxu0
        %v2378 = vadd.f32 %v2125, %v2316
        %v2379 = vadd.f32 %v2128, %v2319
        %v2380 = vadd.f32 %v2133, %v2324
        %v2381 = vadd.f32 %v2136, %v2327
        %v2382 = vadd.f32 %v2141, %v2332
        %v2383 = vadd.f32 %v2144, %v2335
        %v2384 = vadd.f32 %v2149, %v2340
        %v2385 = vadd.f32 %v2152, %v2343
        %v2386 = vadd.f32 %v2157, %v2348
        %v2387 = vadd.f32 %v2160, %v2351
        %v2388 = vadd.f32 %v2165, %v2356
        %v2389 = vadd.f32 %v2168, %v2359
        %v2390 = vadd.f32 %v2173, %v2364
        %v2391 = vadd.f32 %v2176, %v2367
        %v2392 = vadd.f32 %v2181, %v2372
        %v2393 = vadd.f32 %v2184, %v2375
        %v2394 = vld [vmem:[#allocation3 + $0x40] sm:$0x3]
        %s2395 = scalar_lea.vmem %s5, 192
        %v2396 = vld [vmem:[%s2395] sm:$0xf]
        %v2397 = vld [vmem:[%s2395 + $0x4] sm:$0xf]
        %v2398 = vld [vmem:[%s2395 + $0x8] sm:$0xf]
        %v2399 = vld [vmem:[%s2395 + $0xc] sm:$0xf]
        %v2400 = vld [vmem:[%s2395 + $0x10] sm:$0xf]
        %v2401 = vld [vmem:[%s2395 + $0x14] sm:$0xf]
        %v2402 = vld [vmem:[%s2395 + $0x18] sm:$0xf]
        %v2403 = vld [vmem:[%s2395 + $0x1c] sm:$0xf]
        %v2404 = vld [vmem:[%s2395 + $0x20] sm:$0xf]
        %v2405 = vld [vmem:[%s2395 + $0x24] sm:$0xf]
        %v2406 = vld [vmem:[%s2395 + $0x28] sm:$0xf]
        %v2407 = vld [vmem:[%s2395 + $0x2c] sm:$0xf]
        %v2408 = vld [vmem:[%s2395 + $0x30] sm:$0xf]
        %v2409 = vld [vmem:[%s2395 + $0x34] sm:$0xf]
        %v2410 = vld [vmem:[%s2395 + $0x38] sm:$0xf]
        %v2411 = vld [vmem:[%s2395 + $0x3c] sm:$0xf]
        %v2413 = vunpack.c.l.b16 %v2394
        %v2414 = vpack.c.b16 %v2413, %v2413
        %v2416 = vshrl.u32 %v2207, 16
        %v2418 = vrot.slane %v2416, 1
        %v2419 = vshll.u32 %v2207, 16
        %v2421 = vrot.slane %v2419, 2
        %v2422 = vor.u32 %v2418, %v2421
        %v2423 = vrot.slane %v1825, 1
        %v2424 = vrot.slane %v1821, 2
        %v2425 = vor.u32 %v2423, %v2424
        %v2426 = vsel %vm1153, %v2422, %v2425
        %v2427 = vrot.slane %v1833, 1
        %v2428 = vrot.slane %v1829, 2
        %v2429 = vor.u32 %v2427, %v2428
        %v2430 = vsel %vm1153, %v2425, %v2429
        %v2431 = vrot.slane %v1841, 1
        %v2432 = vrot.slane %v1837, 2
        %v2433 = vor.u32 %v2431, %v2432
        %v2434 = vsel %vm1153, %v2429, %v2433
        %v2435 = vrot.slane %v1849, 1
        %v2436 = vrot.slane %v1845, 2
        %v2437 = vor.u32 %v2435, %v2436
        %v2438 = vsel %vm1153, %v2433, %v2437
        %v2439 = vrot.slane %v1857, 1
        %v2440 = vrot.slane %v1853, 2
        %v2441 = vor.u32 %v2439, %v2440
        %v2442 = vsel %vm1153, %v2437, %v2441
        %v2443 = vrot.slane %v1865, 1
        %v2444 = vrot.slane %v1861, 2
        %v2445 = vor.u32 %v2443, %v2444
        %v2446 = vsel %vm1153, %v2441, %v2445
        %v2447 = vrot.slane %v1873, 1
        %v2448 = vrot.slane %v1869, 2
        %v2449 = vor.u32 %v2447, %v2448
        %v2450 = vsel %vm1153, %v2445, %v2449
        %v2452 = vshrl.u32 %v2414, 16
        %v2454 = vrot.slane %v2452, 1
        %v2455 = vshll.u32 %v2414, 16
        %v2457 = vrot.slane %v2455, 2
        %v2458 = vor.u32 %v2454, %v2457
        %v2459 = vsel %vm1153, %v2449, %v2458
        %v2484 = vunpack.c.l.b16 %v2396
        %v2485 = vunpack.c.l.b16 %v2397
        %v2486 = vunpack.c.l.b16 %v2398
        %v2487 = vunpack.c.l.b16 %v2399
        %v2488 = vunpack.c.l.b16 %v2400
        %v2489 = vunpack.c.l.b16 %v2401
        %v2490 = vunpack.c.l.b16 %v2402
        %v2491 = vunpack.c.l.b16 %v2403
        %v2492 = vunpack.c.l.b16 %v2404
        %v2493 = vunpack.c.l.b16 %v2405
        %v2494 = vunpack.c.l.b16 %v2406
        %v2495 = vunpack.c.l.b16 %v2407
        %v2496 = vunpack.c.l.b16 %v2408
        %v2497 = vunpack.c.l.b16 %v2409
        %v2498 = vunpack.c.l.b16 %v2410
        %v2499 = vunpack.c.l.b16 %v2411
        %v2500 = vpack.c.b16 %v2485, %v2484
        %v2501 = vpack.c.b16 %v2487, %v2486
        %v2502 = vpack.c.b16 %v2489, %v2488
        %v2503 = vpack.c.b16 %v2491, %v2490
        %v2504 = vpack.c.b16 %v2493, %v2492
        %v2505 = vpack.c.b16 %v2495, %v2494
        %v2506 = vpack.c.b16 %v2497, %v2496
        %v2507 = vpack.c.b16 %v2499, %v2498
        %2516 = vmatprep.subr.bf16.mxu0 0
        %2517 = vmatpush1.bf16.msra.mxu0 %v2507
        %2518 = vmatprep.subr.bf16.mxu0 0
        %2519 = vmatpush1.bf16.msra.mxu0 %v2506
        %2520 = vmatprep.subr.bf16.mxu0 0
        %2521 = vmatpush1.bf16.msra.mxu0 %v2505
        %2522 = vmatprep.subr.bf16.mxu0 0
        %2523 = vmatpush1.bf16.msra.mxu0 %v2504
        %2524 = vmatprep.subr.bf16.mxu0 0
        %2525 = vmatpush1.bf16.msra.mxu0 %v2503
        %2526 = vmatprep.subr.bf16.mxu0 0
        %2527 = vmatpush1.bf16.msra.mxu0 %v2502
        %2528 = vmatprep.subr.bf16.mxu0 0
        %2529 = vmatpush1.bf16.msra.mxu0 %v2501
        %2530 = vmatprep.subr.bf16.mxu0 0
        %2531 = vmatpush1.bf16.msra.mxu0 %v2500
        %2532 = vmatprep.subr.bf16.mxu0 0
        %2533 = vmatpush2.bf16.msra.mxu0 0
        %2534 = vmatprep.subr.bf16.mxu0 0
        %2535 = vmatpush2.bf16.msra.mxu0 0
        %2536 = vmatprep.subr.bf16.mxu0 0
        %2537 = vmatpush2.bf16.msra.mxu0 0
        %2538 = vmatprep.subr.bf16.mxu0 0
        %2539 = vmatpush2.bf16.msra.mxu0 0
        %2540 = vmatprep.subr.bf16.mxu0 0
        %2541 = vmatpush2.bf16.msra.mxu0 0
        %2542 = vmatprep.subr.bf16.mxu0 0
        %2543 = vmatpush2.bf16.msra.mxu0 0
        %2544 = vmatprep.subr.bf16.mxu0 0
        %2545 = vmatpush2.bf16.msra.mxu0 0
        %2546 = vmatprep.subr.bf16.mxu0 0
        %2547 = vmatpush2.bf16.msra.mxu0 0
        %2548 = vmatprep.mubr.bf16.mxu0 0
        %2549 = vmatmul.mubr.bf16.gmra.mxu0 %v2426
        %v2550 = vpop.f32.mrf.mxu0
        %v2551 = vadd.f32 0.0, %v2550
        %v2552 = vpop.f32.mrf.mxu0
        %v2553 = vpop.f32.mrf.mxu0
        %v2554 = vadd.f32 0.0, %v2553
        %v2555 = vpop.f32.mrf.mxu0
        %2556 = vmatprep.mubr.bf16.mxu0 0
        %2557 = vmatmul.mubr.bf16.gmra.mxu0 %v2430
        %v2558 = vpop.f32.mrf.mxu0
        %v2559 = vadd.f32 0.0, %v2558
        %v2560 = vpop.f32.mrf.mxu0
        %v2561 = vpop.f32.mrf.mxu0
        %v2562 = vadd.f32 0.0, %v2561
        %v2563 = vpop.f32.mrf.mxu0
        %2564 = vmatprep.mubr.bf16.mxu0 0
        %2565 = vmatmul.mubr.bf16.gmra.mxu0 %v2434
        %v2566 = vpop.f32.mrf.mxu0
        %v2567 = vadd.f32 0.0, %v2566
        %v2568 = vpop.f32.mrf.mxu0
        %v2569 = vpop.f32.mrf.mxu0
        %v2570 = vadd.f32 0.0, %v2569
        %v2571 = vpop.f32.mrf.mxu0
        %2572 = vmatprep.mubr.bf16.mxu0 0
        %2573 = vmatmul.mubr.bf16.gmra.mxu0 %v2438
        %v2574 = vpop.f32.mrf.mxu0
        %v2575 = vadd.f32 0.0, %v2574
        %v2576 = vpop.f32.mrf.mxu0
        %v2577 = vpop.f32.mrf.mxu0
        %v2578 = vadd.f32 0.0, %v2577
        %v2579 = vpop.f32.mrf.mxu0
        %2580 = vmatprep.mubr.bf16.mxu0 0
        %2581 = vmatmul.mubr.bf16.gmra.mxu0 %v2442
        %v2582 = vpop.f32.mrf.mxu0
        %v2583 = vadd.f32 0.0, %v2582
        %v2584 = vpop.f32.mrf.mxu0
        %v2585 = vpop.f32.mrf.mxu0
        %v2586 = vadd.f32 0.0, %v2585
        %v2587 = vpop.f32.mrf.mxu0
        %2588 = vmatprep.mubr.bf16.mxu0 0
        %2589 = vmatmul.mubr.bf16.gmra.mxu0 %v2446
        %v2590 = vpop.f32.mrf.mxu0
        %v2591 = vadd.f32 0.0, %v2590
        %v2592 = vpop.f32.mrf.mxu0
        %v2593 = vpop.f32.mrf.mxu0
        %v2594 = vadd.f32 0.0, %v2593
        %v2595 = vpop.f32.mrf.mxu0
        %2596 = vmatprep.mubr.bf16.mxu0 0
        %2597 = vmatmul.mubr.bf16.gmra.mxu0 %v2450
        %v2598 = vpop.f32.mrf.mxu0
        %v2599 = vadd.f32 0.0, %v2598
        %v2600 = vpop.f32.mrf.mxu0
        %v2601 = vpop.f32.mrf.mxu0
        %v2602 = vadd.f32 0.0, %v2601
        %v2603 = vpop.f32.mrf.mxu0
        %2604 = vmatprep.mubr.bf16.mxu0 0
        %2605 = vmatmul.mubr.bf16.gmra.mxu0 %v2459
        %v2606 = vpop.f32.mrf.mxu0
        %v2607 = vadd.f32 0.0, %v2606
        %v2608 = vpop.f32.mrf.mxu0
        %v2609 = vpop.f32.mrf.mxu0
        %v2610 = vadd.f32 0.0, %v2609
        %v2611 = vpop.f32.mrf.mxu0
        %2612 = vdwg.mxu0
        %v2613 = vadd.f32 %v2378, %v2551
        %v2614 = vadd.f32 %v2379, %v2554
        %v2615 = vadd.f32 %v2380, %v2559
        %v2616 = vadd.f32 %v2381, %v2562
        %v2617 = vadd.f32 %v2382, %v2567
        %v2618 = vadd.f32 %v2383, %v2570
        %v2619 = vadd.f32 %v2384, %v2575
        %v2620 = vadd.f32 %v2385, %v2578
        %v2621 = vadd.f32 %v2386, %v2583
        %v2622 = vadd.f32 %v2387, %v2586
        %v2623 = vadd.f32 %v2388, %v2591
        %v2624 = vadd.f32 %v2389, %v2594
        %v2625 = vadd.f32 %v2390, %v2599
        %v2626 = vadd.f32 %v2391, %v2602
        %v2627 = vadd.f32 %v2392, %v2607
        %v2628 = vadd.f32 %v2393, %v2610
        %v2629 = vld [vmem:[#allocation3] sm:$0xc]
        %s2630 = scalar_lea.vmem %s5, 256
        %v2631 = vld [vmem:[%s2630] sm:$0xf]
        %v2632 = vld [vmem:[%s2630 + $0x4] sm:$0xf]
        %v2633 = vld [vmem:[%s2630 + $0x8] sm:$0xf]
        %v2634 = vld [vmem:[%s2630 + $0xc] sm:$0xf]
        %v2635 = vld [vmem:[%s2630 + $0x10] sm:$0xf]
        %v2636 = vld [vmem:[%s2630 + $0x14] sm:$0xf]
        %v2637 = vld [vmem:[%s2630 + $0x18] sm:$0xf]
        %v2638 = vld [vmem:[%s2630 + $0x1c] sm:$0xf]
        %v2639 = vld [vmem:[%s2630 + $0x20] sm:$0xf]
        %v2640 = vld [vmem:[%s2630 + $0x24] sm:$0xf]
        %v2641 = vld [vmem:[%s2630 + $0x28] sm:$0xf]
        %v2642 = vld [vmem:[%s2630 + $0x2c] sm:$0xf]
        %v2643 = vld [vmem:[%s2630 + $0x30] sm:$0xf]
        %v2644 = vld [vmem:[%s2630 + $0x34] sm:$0xf]
        %v2645 = vld [vmem:[%s2630 + $0x38] sm:$0xf]
        %v2646 = vld [vmem:[%s2630 + $0x3c] sm:$0xf]
        %v2648 = vunpack.c.l.b16 %v2629
        %v2649 = vpack.c.b16 %v1788, %v2648
        %v2650 = vrot.slane %v2649, 2
        %v2651 = vrot.slane %v1805, 2
        %v2652 = vsel %vm1373, %v2650, %v2651
        %v2653 = vrot.slane %v1806, 2
        %v2654 = vsel %vm1373, %v2651, %v2653
        %v2655 = vrot.slane %v1807, 2
        %v2656 = vsel %vm1373, %v2653, %v2655
        %v2657 = vrot.slane %v1808, 2
        %v2658 = vsel %vm1373, %v2655, %v2657
        %v2659 = vrot.slane %v1809, 2
        %v2660 = vsel %vm1373, %v2657, %v2659
        %v2661 = vrot.slane %v1810, 2
        %v2662 = vsel %vm1373, %v2659, %v2661
        %v2663 = vrot.slane %v1811, 2
        %v2664 = vsel %vm1373, %v2661, %v2663
        %v2665 = vrot.slane %v2414, 2
        %v2666 = vsel %vm1373, %v2663, %v2665
        %v2691 = vunpack.c.l.b16 %v2631
        %v2692 = vunpack.c.l.b16 %v2632
        %v2693 = vunpack.c.l.b16 %v2633
        %v2694 = vunpack.c.l.b16 %v2634
        %v2695 = vunpack.c.l.b16 %v2635
        %v2696 = vunpack.c.l.b16 %v2636
        %v2697 = vunpack.c.l.b16 %v2637
        %v2698 = vunpack.c.l.b16 %v2638
        %v2699 = vunpack.c.l.b16 %v2639
        %v2700 = vunpack.c.l.b16 %v2640
        %v2701 = vunpack.c.l.b16 %v2641
        %v2702 = vunpack.c.l.b16 %v2642
        %v2703 = vunpack.c.l.b16 %v2643
        %v2704 = vunpack.c.l.b16 %v2644
        %v2705 = vunpack.c.l.b16 %v2645
        %v2706 = vunpack.c.l.b16 %v2646
        %v2707 = vpack.c.b16 %v2692, %v2691
        %v2708 = vpack.c.b16 %v2694, %v2693
        %v2709 = vpack.c.b16 %v2696, %v2695
        %v2710 = vpack.c.b16 %v2698, %v2697
        %v2711 = vpack.c.b16 %v2700, %v2699
        %v2712 = vpack.c.b16 %v2702, %v2701
        %v2713 = vpack.c.b16 %v2704, %v2703
        %v2714 = vpack.c.b16 %v2706, %v2705
        %2723 = vmatprep.subr.bf16.mxu0 0
        %2724 = vmatpush1.bf16.msra.mxu0 %v2714
        %2725 = vmatprep.subr.bf16.mxu0 0
        %2726 = vmatpush1.bf16.msra.mxu0 %v2713
        %2727 = vmatprep.subr.bf16.mxu0 0
        %2728 = vmatpush1.bf16.msra.mxu0 %v2712
        %2729 = vmatprep.subr.bf16.mxu0 0
        %2730 = vmatpush1.bf16.msra.mxu0 %v2711
        %2731 = vmatprep.subr.bf16.mxu0 0
        %2732 = vmatpush1.bf16.msra.mxu0 %v2710
        %2733 = vmatprep.subr.bf16.mxu0 0
        %2734 = vmatpush1.bf16.msra.mxu0 %v2709
        %2735 = vmatprep.subr.bf16.mxu0 0
        %2736 = vmatpush1.bf16.msra.mxu0 %v2708
        %2737 = vmatprep.subr.bf16.mxu0 0
        %2738 = vmatpush1.bf16.msra.mxu0 %v2707
        %2739 = vmatprep.subr.bf16.mxu0 0
        %2740 = vmatpush2.bf16.msra.mxu0 0
        %2741 = vmatprep.subr.bf16.mxu0 0
        %2742 = vmatpush2.bf16.msra.mxu0 0
        %2743 = vmatprep.subr.bf16.mxu0 0
        %2744 = vmatpush2.bf16.msra.mxu0 0
        %2745 = vmatprep.subr.bf16.mxu0 0
        %2746 = vmatpush2.bf16.msra.mxu0 0
        %2747 = vmatprep.subr.bf16.mxu0 0
        %2748 = vmatpush2.bf16.msra.mxu0 0
        %2749 = vmatprep.subr.bf16.mxu0 0
        %2750 = vmatpush2.bf16.msra.mxu0 0
        %2751 = vmatprep.subr.bf16.mxu0 0
        %2752 = vmatpush2.bf16.msra.mxu0 0
        %2753 = vmatprep.subr.bf16.mxu0 0
        %2754 = vmatpush2.bf16.msra.mxu0 0
        %2755 = vmatprep.mubr.bf16.mxu0 0
        %2756 = vmatmul.mubr.bf16.gmra.mxu0 %v2652
        %v2757 = vpop.f32.mrf.mxu0
        %v2758 = vadd.f32 0.0, %v2757
        %v2759 = vpop.f32.mrf.mxu0
        %v2760 = vpop.f32.mrf.mxu0
        %v2761 = vadd.f32 0.0, %v2760
        %v2762 = vpop.f32.mrf.mxu0
        %2763 = vmatprep.mubr.bf16.mxu0 0
        %2764 = vmatmul.mubr.bf16.gmra.mxu0 %v2654
        %v2765 = vpop.f32.mrf.mxu0
        %v2766 = vadd.f32 0.0, %v2765
        %v2767 = vpop.f32.mrf.mxu0
        %v2768 = vpop.f32.mrf.mxu0
        %v2769 = vadd.f32 0.0, %v2768
        %v2770 = vpop.f32.mrf.mxu0
        %2771 = vmatprep.mubr.bf16.mxu0 0
        %2772 = vmatmul.mubr.bf16.gmra.mxu0 %v2656
        %v2773 = vpop.f32.mrf.mxu0
        %v2774 = vadd.f32 0.0, %v2773
        %v2775 = vpop.f32.mrf.mxu0
        %v2776 = vpop.f32.mrf.mxu0
        %v2777 = vadd.f32 0.0, %v2776
        %v2778 = vpop.f32.mrf.mxu0
        %2779 = vmatprep.mubr.bf16.mxu0 0
        %2780 = vmatmul.mubr.bf16.gmra.mxu0 %v2658
        %v2781 = vpop.f32.mrf.mxu0
        %v2782 = vadd.f32 0.0, %v2781
        %v2783 = vpop.f32.mrf.mxu0
        %v2784 = vpop.f32.mrf.mxu0
        %v2785 = vadd.f32 0.0, %v2784
        %v2786 = vpop.f32.mrf.mxu0
        %2787 = vmatprep.mubr.bf16.mxu0 0
        %2788 = vmatmul.mubr.bf16.gmra.mxu0 %v2660
        %v2789 = vpop.f32.mrf.mxu0
        %v2790 = vadd.f32 0.0, %v2789
        %v2791 = vpop.f32.mrf.mxu0
        %v2792 = vpop.f32.mrf.mxu0
        %v2793 = vadd.f32 0.0, %v2792
        %v2794 = vpop.f32.mrf.mxu0
        %2795 = vmatprep.mubr.bf16.mxu0 0
        %2796 = vmatmul.mubr.bf16.gmra.mxu0 %v2662
        %v2797 = vpop.f32.mrf.mxu0
        %v2798 = vadd.f32 0.0, %v2797
        %v2799 = vpop.f32.mrf.mxu0
        %v2800 = vpop.f32.mrf.mxu0
        %v2801 = vadd.f32 0.0, %v2800
        %v2802 = vpop.f32.mrf.mxu0
        %2803 = vmatprep.mubr.bf16.mxu0 0
        %2804 = vmatmul.mubr.bf16.gmra.mxu0 %v2664
        %v2805 = vpop.f32.mrf.mxu0
        %v2806 = vadd.f32 0.0, %v2805
        %v2807 = vpop.f32.mrf.mxu0
        %v2808 = vpop.f32.mrf.mxu0
        %v2809 = vadd.f32 0.0, %v2808
        %v2810 = vpop.f32.mrf.mxu0
        %2811 = vmatprep.mubr.bf16.mxu0 0
        %2812 = vmatmul.mubr.bf16.gmra.mxu0 %v2666
        %v2813 = vpop.f32.mrf.mxu0
        %v2814 = vadd.f32 0.0, %v2813
        %v2815 = vpop.f32.mrf.mxu0
        %v2816 = vpop.f32.mrf.mxu0
        %v2817 = vadd.f32 0.0, %v2816
        %v2818 = vpop.f32.mrf.mxu0
        %2819 = vdwg.mxu0
        %v2820 = vadd.f32 %v2613, %v2758
        %v2821 = vadd.f32 %v2614, %v2761
        %v2822 = vadd.f32 %v2615, %v2766
        %v2823 = vadd.f32 %v2616, %v2769
        %v2824 = vadd.f32 %v2617, %v2774
        %v2825 = vadd.f32 %v2618, %v2777
        %v2826 = vadd.f32 %v2619, %v2782
        %v2827 = vadd.f32 %v2620, %v2785
        %v2828 = vadd.f32 %v2621, %v2790
        %v2829 = vadd.f32 %v2622, %v2793
        %v2830 = vadd.f32 %v2623, %v2798
        %v2831 = vadd.f32 %v2624, %v2801
        %v2832 = vadd.f32 %v2625, %v2806
        %v2833 = vadd.f32 %v2626, %v2809
        %v2834 = vadd.f32 %v2627, %v2814
        %v2835 = vadd.f32 %v2628, %v2817
        %2836 = vst [vmem:[%s259] sm:$0xff] %v2820
        %2837 = vst [vmem:[%s259 + $0x8] sm:$0xff] %v2821
        %2838 = vst [vmem:[%s259 + $0x10] sm:$0xff] %v2822
        %2839 = vst [vmem:[%s259 + $0x18] sm:$0xff] %v2823
        %2840 = vst [vmem:[%s259 + $0x20] sm:$0xff] %v2824
        %2841 = vst [vmem:[%s259 + $0x28] sm:$0xff] %v2825
        %2842 = vst [vmem:[%s259 + $0x30] sm:$0xff] %v2826
        %2843 = vst [vmem:[%s259 + $0x38] sm:$0xff] %v2827
        %2844 = vst [vmem:[%s259 + $0x40] sm:$0xff] %v2828
        %2845 = vst [vmem:[%s259 + $0x48] sm:$0xff] %v2829
        %2846 = vst [vmem:[%s259 + $0x50] sm:$0xff] %v2830
        %2847 = vst [vmem:[%s259 + $0x58] sm:$0xff] %v2831
        %2848 = vst [vmem:[%s259 + $0x60] sm:$0xff] %v2832
        %2849 = vst [vmem:[%s259 + $0x68] sm:$0xff] %v2833
        %2850 = vst [vmem:[%s259 + $0x70] sm:$0xff] %v2834
        %2851 = vst [vmem:[%s259 + $0x78] sm:$0xff] %v2835
        %s2852 = sand.u32 %s160, 1
        %s2853 = scalar_lea.sflag [#allocation6], %s2852
        %s2854 = sand.u32 %s160, 1
        %s2855 = smul.addr %s2854, 128
        %s2856 = scalar_lea.vmem [#allocation7], %s2855
        // Predicated region
        $region53: #{tpu_custom_call.1} parent=43 // pred_check
          %p2857 = pneg %p170
        $region54: #{tpu_custom_call.1} parent=43 // pred_check_branch
          %2859 = sbr.rel (%p2857) target = $region56
        $region55: #{tpu_custom_call.1} parent=43 // pred_region
          %s2861 = ssub.s32 2048, 2048
          %2862 = vsyncadd %s2853, %s2861
          %s2863 = smul.addr %s21, 16
          %s2864 = smul.addr %s2863, 128
          %s2865 = scalar_lea.hbm %s6, %s2864
          %s2866 = sshll.u32 %s2856, 4
          %s2867 = int_to_ptr.vmem [resolvable:$true] %s2866
          %2872 = dma.vmem_to_hbm [thread:$0]  %s2867, 2048, %s2865, %s2853, 128, 128, 8
        $region56: #{tpu_custom_call.1} parent=43 // pred_fallthru
          _
      $region44: #{tpu_custom_call.1} parent=5 // pred_fallthru
        _
      %p2873 = scmp.le.s32.totalorder 2, %s16
      // Predicated region
      $region57: #{tpu_custom_call.1} parent=5 // pred_check
        %p2874 = pneg %p2873
      $region58: #{tpu_custom_call.1} parent=5 // pred_check_branch
        %2876 = sbr.rel (%p2874) target = $region60
      $region59: #{tpu_custom_call.1} parent=5 // pred_region
        %s2877 = ssub.s32 %s16, 2
        // Predicated region
        $region61: #{tpu_custom_call.1} parent=59 // pred_check
          %p2878 = pneg %p176
        $region62: #{tpu_custom_call.1} parent=59 // pred_check_branch
          %2880 = sbr.rel (%p2878) target = $region64
        $region63: #{tpu_custom_call.1} parent=59 // pred_region
          %s2881 = sand.u32 %s161, 1
          %s2882 = scalar_lea.sflag [#allocation6], %s2881
          %s2883 = sand.u32 %s161, 1
          %s2884 = smul.addr %s2883, 128
          %s2885 = scalar_lea.vmem [#allocation7], %s2884
          %2886 = dma.done %s2882, 2048
        $region64: #{tpu_custom_call.1} parent=59 // pred_fallthru
          _
      $region60: #{tpu_custom_call.1} parent=5 // pred_fallthru
        _
    $region6: #{tpu_custom_call.1} parent=1 // loop_footer
      %s20 = sadd.s32 1, %s16
    $region7: #{tpu_custom_call.1} parent=1 // loop_footer_branch
      %15 = sbr.rel target = $region3
    $region8: #{tpu_custom_call.1} parent=1 // loop_exit
      _
    %2887 = vsyncpa [#allocation5], 1
    %s2888 = scalar_lea.sflag [#allocation5], 1
    %2889 = vsyncpa %s2888, 1
    %2890 = vsyncpa [#allocation6], 1
    %s2891 = scalar_lea.sflag [#allocation6], 1
    %2892 = vsyncpa %s2891, 1

</llo_original>
